<compile_context>
chip_gen: v7x
topology: tpu7x:2x2x1
jax: 0.10.0
libtpu: 0.0.40
codegen_flags: <defaults>
</compile_context>

<pallas_src>
import math
import functools

import jax
import jax.numpy as jnp
from jax import lax
from jax.experimental import pallas as pl
from jax.experimental.pallas import tpu as pltpu

MATMUL_DTYPE = jnp.bfloat16   # MXU operand dtype; accumulation stays float32
LN_EPS = 1e-12                # matches the reference implementation's LayerNorm eps

_M_TILES = (256, 128, 64, 32, 16, 8)   # sublane-dim tile candidates (multiples of 8)
_N_TILES = (512, 256, 128)             # lane-dim tile candidates (multiples of 128)
_K_TILES = (512, 256, 128)             # reduction-dim tile candidates


def _pick_tile(dim, candidates):
    """Largest candidate that evenly divides `dim`, else the full dim (legal block)."""
    for c in candidates:
        if dim % c == 0:
            return c
    return dim


# ----------------------------------------------------------------------------
# Pallas kernels
# ----------------------------------------------------------------------------
def _matmul_kernel(x_ref, w_ref, b_ref, o_ref, acc_ref):
    """Tiled y = x @ w + b with K-reduction grid axis and f32 accumulator."""
    @pl.when(pl.program_id(2) == 0)
    def _():
        acc_ref[...] = jnp.zeros_like(acc_ref)

    acc_ref[...] += jnp.dot(
        x_ref[...].astype(MATMUL_DTYPE), w_ref[...].astype(MATMUL_DTYPE),
        preferred_element_type=jnp.float32)

    @pl.when(pl.program_id(2) == pl.num_programs(2) - 1)
    def _():
        o_ref[...] = (acc_ref[...] + b_ref[...]).astype(o_ref.dtype)


def _matmul_add_ln_kernel(x_ref, w_ref, b_ref, r_ref, g_ref, bb_ref, o_ref, acc_ref,
                          *, eps):
    """y = LayerNorm((x @ w + b) + resid) * gamma + beta, fused in one kernel."""
    @pl.when(pl.program_id(1) == 0)
    def _():
        acc_ref[...] = jnp.zeros_like(acc_ref)

    acc_ref[...] += jnp.dot(
        x_ref[...].astype(MATMUL_DTYPE), w_ref[...].astype(MATMUL_DTYPE),
        preferred_element_type=jnp.float32)

    @pl.when(pl.program_id(1) == pl.num_programs(1) - 1)
    def _():
        y = acc_ref[...] + b_ref[...] + r_ref[...]
        mean = jnp.mean(y, axis=-1, keepdims=True)
        var = jnp.mean(jnp.square(y - mean), axis=-1, keepdims=True)  # unbiased=False
        xn = (y - mean) * lax.rsqrt(var + eps)
        o_ref[...] = (xn * g_ref[...] + bb_ref[...]).astype(o_ref.dtype)


def _ffn_add_ln_kernel(x_ref, w1_ref, b1_ref, w2_ref, b2_ref, r_ref, g_ref, bb_ref,
                       o_ref, acc_ref, *, eps):
    """Fused FFN: relu(x@w1+b1)@w2 (+b2) + resid, then LayerNorm. Hidden dim is the
    reduction grid axis; the intermediate activation never touches HBM."""
    @pl.when(pl.program_id(1) == 0)
    def _():
        acc_ref[...] = jnp.zeros_like(acc_ref)

    hid = jnp.dot(x_ref[...].astype(MATMUL_DTYPE), w1_ref[...].astype(MATMUL_DTYPE),
                  preferred_element_type=jnp.float32) + b1_ref[...]
    hid = jnp.maximum(hid, 0.0)
    acc_ref[...] += jnp.dot(hid.astype(MATMUL_DTYPE), w2_ref[...].astype(MATMUL_DTYPE),
                            preferred_element_type=jnp.float32)

    @pl.when(pl.program_id(1) == pl.num_programs(1) - 1)
    def _():
        y = acc_ref[...] + b2_ref[...] + r_ref[...]
        mean = jnp.mean(y, axis=-1, keepdims=True)
        var = jnp.mean(jnp.square(y - mean), axis=-1, keepdims=True)
        xn = (y - mean) * lax.rsqrt(var + eps)
        o_ref[...] = (xn * g_ref[...] + bb_ref[...]).astype(o_ref.dtype)


def _attn_kernel(q_ref, k_ref, v_ref, m_ref, o_ref, *, scale):
    """All heads of one batch element per program; softmax in f32."""
    q = q_ref[0].astype(MATMUL_DTYPE)     # (H, Lq, Dh)
    k = k_ref[0].astype(MATMUL_DTYPE)     # (H, Lk, Dh)
    v = v_ref[0].astype(MATMUL_DTYPE)     # (H, Lk, Dh)
    m = m_ref[0]                          # (Lq, Lk) float {0, 1}, shared by all heads

    s = jnp.einsum('hqd,hkd->hqk', q, k, preferred_element_type=jnp.float32) * scale
    s = jnp.where(m[None, :, :] > 0.5, s, jnp.float32(-10000.0))  # masked_fill(mask==0)
    s = s - jnp.max(s, axis=-1, keepdims=True)
    p = jnp.exp(s)
    p = p * pl.reciprocal(jnp.sum(p, axis=-1, keepdims=True), approx=True)
    o = jnp.einsum('hqk,hkd->hqd', p.astype(MATMUL_DTYPE), v,
                   preferred_element_type=jnp.float32)
    o_ref[0] = o.astype(o_ref.dtype)


# ----------------------------------------------------------------------------
# Kernel wrappers
# ----------------------------------------------------------------------------
def linear2d(x, w, b):
    M, K = x.shape
    N = w.shape[1]
    tm = _pick_tile(M, _M_TILES)
    tn = _pick_tile(N, _N_TILES)
    tk = _pick_tile(K, _K_TILES)
    grid = (M // tm, N // tn, K // tk)
    return pl.pallas_call(
        _matmul_kernel,
        out_shape=jax.ShapeDtypeStruct((M, N), jnp.float32),
        grid=grid,
        in_specs=[
            pl.BlockSpec((tm, tk), lambda i, j, k: (i, k)),
            pl.BlockSpec((tk, tn), lambda i, j, k: (k, j)),
            pl.BlockSpec((1, tn), lambda i, j, k: (0, j)),
        ],
        out_specs=pl.BlockSpec((tm, tn), lambda i, j, k: (i, j)),
        scratch_shapes=[pltpu.VMEM((tm, tn), jnp.float32)],
        compiler_params=pltpu.CompilerParams(
            dimension_semantics=("parallel", "parallel", "arbitrary")),
    )(x, w, b.reshape(1, N))


def linear3d(x, w, b):
    B, S, K = x.shape
    return linear2d(x.reshape(B * S, K), w, b).reshape(B, S, w.shape[1])


def linear_add_ln3d(x, w, b, resid, gamma, beta, eps=LN_EPS):
    """Fused: LayerNorm((x @ w + b) + resid). Output width is kept whole per tile
    because LayerNorm needs the full feature row."""
    B, S, K = x.shape
    N = w.shape[1]
    M = B * S
    tm = _pick_tile(M, _M_TILES)
    tk = _pick_tile(K, _K_TILES)
    grid = (M // tm, K // tk)
    y = pl.pallas_call(
        functools.partial(_matmul_add_ln_kernel, eps=eps),
        out_shape=jax.ShapeDtypeStruct((M, N), jnp.float32),
        grid=grid,
        in_specs=[
            pl.BlockSpec((tm, tk), lambda i, k: (i, k)),
            pl.BlockSpec((tk, N), lambda i, k: (k, 0)),
            pl.BlockSpec((1, N), lambda i, k: (0, 0)),
            pl.BlockSpec((tm, N), lambda i, k: (i, 0)),
            pl.BlockSpec((1, N), lambda i, k: (0, 0)),
            pl.BlockSpec((1, N), lambda i, k: (0, 0)),
        ],
        out_specs=pl.BlockSpec((tm, N), lambda i, k: (i, 0)),
        scratch_shapes=[pltpu.VMEM((tm, N), jnp.float32)],
        compiler_params=pltpu.CompilerParams(
            dimension_semantics=("parallel", "arbitrary")),
    )(x.reshape(M, K), w, b.reshape(1, N),
      resid.reshape(M, N), gamma.reshape(1, N), beta.reshape(1, N))
    return y.reshape(B, S, N)


def ffn_add_ln3d(x, w1, b1, w2, b2, resid, gamma, beta, eps=LN_EPS):
    B, S, D = x.shape
    Hd = w1.shape[1]
    M = B * S
    tm = _pick_tile(M, _M_TILES)
    th = _pick_tile(Hd, _K_TILES)
    grid = (M // tm, Hd // th)
    y = pl.pallas_call(
        functools.partial(_ffn_add_ln_kernel, eps=eps),
        out_shape=jax.ShapeDtypeStruct((M, D), jnp.float32),
        grid=grid,
        in_specs=[
            pl.BlockSpec((tm, D), lambda i, h: (i, 0)),
            pl.BlockSpec((D, th), lambda i, h: (0, h)),
            pl.BlockSpec((1, th), lambda i, h: (0, h)),
            pl.BlockSpec((th, D), lambda i, h: (h, 0)),
            pl.BlockSpec((1, D), lambda i, h: (0, 0)),
            pl.BlockSpec((tm, D), lambda i, h: (i, 0)),
            pl.BlockSpec((1, D), lambda i, h: (0, 0)),
            pl.BlockSpec((1, D), lambda i, h: (0, 0)),
        ],
        out_specs=pl.BlockSpec((tm, D), lambda i, h: (i, 0)),
        scratch_shapes=[pltpu.VMEM((tm, D), jnp.float32)],
        compiler_params=pltpu.CompilerParams(
            dimension_semantics=("parallel", "arbitrary")),
    )(x.reshape(M, D), w1, b1.reshape(1, Hd), w2, b2.reshape(1, D),
      resid.reshape(M, D), gamma.reshape(1, D), beta.reshape(1, D))
    return y.reshape(B, S, D)


def attention_pallas(q, k, v, mask, scale):
    """q/k/v: (B, H, L, Dh); mask: (B, Lq, Lk) float {0,1} shared across heads."""
    B, H, Lq, Dh = q.shape
    Lk = k.shape[2]
    return pl.pallas_call(
        functools.partial(_attn_kernel, scale=scale),
        out_shape=jax.ShapeDtypeStruct((B, H, Lq, Dh), jnp.float32),
        grid=(B,),
        in_specs=[
            pl.BlockSpec((1, H, Lq, Dh), lambda b: (b, 0, 0, 0)),
            pl.BlockSpec((1, H, Lk, Dh), lambda b: (b, 0, 0, 0)),
            pl.BlockSpec((1, H, Lk, Dh), lambda b: (b, 0, 0, 0)),
            pl.BlockSpec((1, Lq, Lk), lambda b: (b, 0, 0)),
        ],
        out_specs=pl.BlockSpec((1, H, Lq, Dh), lambda b: (b, 0, 0, 0)),
        compiler_params=pltpu.CompilerParams(dimension_semantics=("parallel",)),
    )(q, k, v, mask)


# ----------------------------------------------------------------------------
# Model building blocks (plain-JAX glue around the Pallas kernels)
# ----------------------------------------------------------------------------
def sinusoidal_pe(max_len, d_model):
    pos = jnp.arange(max_len, dtype=jnp.float32)[:, None]
    i = jnp.arange(0, d_model, 2, dtype=jnp.float32)
    angle = pos / jnp.power(10000.0, i / float(d_model))
    pe = jnp.zeros((max_len, d_model), jnp.float32)
    pe = pe.at[:, 0::2].set(jnp.sin(angle))
    pe = pe.at[:, 1::2].set(jnp.cos(angle))
    return pe


def embed(ids, tok_emb, pos_emb):
    # dropout after embedding is identity at inference
    # TODO(synk): embedding gather stays in XLA (jnp.take); a DMA-gather Pallas
    # kernel would only pay off at much larger vocab/sequence sizes.
    seq_len = ids.shape[1]
    return jnp.take(tok_emb, ids, axis=0) + pos_emb[:seq_len][None, :, :]


def multi_head_attention(q_in, kv_in, p, mask, num_heads):
    """Q/K/V projections (fused) + batched-head attention. The output projection is
    fused with residual-add + LayerNorm by the caller (linear_add_ln3d with wo/bo)."""
    B, Lq, D = q_in.shape
    Lk = kv_in.shape[1]
    Dh = D // num_heads

    if "wqkv" in p:                         # self-attention: single fused QKV matmul
        qkv = linear3d(q_in, p["wqkv"], p["bqkv"])           # (B, Lq, 3D)
        q, k, v = jnp.split(qkv, 3, axis=-1)
    else:                                   # cross-attention: fused K/V matmul
        q = linear3d(q_in, p["wq"], p["bq"])
        kv = linear3d(kv_in, p["wkv"], p["bkv"])             # (B, Lk, 2D)
        k, v = jnp.split(kv, 2, axis=-1)

    # TODO(synk): head split/merge still uses small XLA transposes; a (B,L,H,Dh)
    # native-layout attention kernel would remove them (blocked today by the
    # (8,128) last-dim block rule at Dh=8).
    def split_heads(t, L):
        return t.reshape(B, L, num_heads, Dh).transpose(0, 2, 1, 3)

    o = attention_pallas(split_heads(q, Lq), split_heads(k, Lk), split_heads(v, Lk),
                         mask, 1.0 / math.sqrt(Dh))
    return o.transpose(0, 2, 1, 3).reshape(B, Lq, D)


def encoder_forward(params, src, src_mask, num_heads):
    x = embed(src, params["tok_emb"], params["pos_emb"])
    for lp in params["layers"]:
        a = multi_head_attention(x, x, lp["attn"], src_mask, num_heads)
        x = linear_add_ln3d(a, lp["attn"]["wo"], lp["attn"]["bo"],
                            x, lp["ln1_g"], lp["ln1_b"])
        x = ffn_add_ln3d(x, lp["ffn"]["w1"], lp["ffn"]["b1"],
                         lp["ffn"]["w2"], lp["ffn"]["b2"],
                         x, lp["ln2_g"], lp["ln2_b"])
    return x


def decoder_forward(params, tgt, enc, tgt_mask, src_mask, num_heads):
    x = embed(tgt, params["tok_emb"], params["pos_emb"])
    for lp in params["layers"]:
        a = multi_head_attention(x, x, lp["self_attn"], tgt_mask, num_heads)
        x = linear_add_ln3d(a, lp["self_attn"]["wo"], lp["self_attn"]["bo"],
                            x, lp["ln1_g"], lp["ln1_b"])
        c = multi_head_attention(x, enc, lp["cross_attn"], src_mask, num_heads)
        x = linear_add_ln3d(c, lp["cross_attn"]["wo"], lp["cross_attn"]["bo"],
                            x, lp["ln2_g"], lp["ln2_b"])
        x = ffn_add_ln3d(x, lp["ffn"]["w1"], lp["ffn"]["b1"],
                         lp["ffn"]["w2"], lp["ffn"]["b2"],
                         x, lp["ln3_g"], lp["ln3_b"])
    return linear3d(x, params["out_w"], params["out_b"])


def make_pad_mask(q_ids, k_ids, pad_idx_q, pad_idx_k):
    qm = (q_ids != pad_idx_q)[:, :, None]          # (B, Lq, 1)
    km = (k_ids != pad_idx_k)[:, None, :]          # (B, 1, Lk)
    return qm & km                                 # (B, Lq, Lk)


def make_causal_mask(len_q, len_k):
    return jnp.tril(jnp.ones((len_q, len_k), dtype=bool))


def transformer_forward(params, src, tgt, *, num_heads, src_pad_idx, tgt_pad_idx):
    src_mask = make_pad_mask(src, src, src_pad_idx, src_pad_idx).astype(jnp.float32)
    tgt_mask = (make_pad_mask(tgt, tgt, tgt_pad_idx, tgt_pad_idx)
                & make_causal_mask(tgt.shape[1], tgt.shape[1])[None, :, :]
                ).astype(jnp.float32)
    enc = encoder_forward(params["encoder"], src, src_mask, num_heads)
    dec = decoder_forward(params["decoder"], tgt, enc, tgt_mask, src_mask, num_heads)
    return dec


# ----------------------------------------------------------------------------
# Deterministic parameter construction (weights stored in bf16, biases/LN in f32)
# ----------------------------------------------------------------------------
def _lin(key, din, dout):
    w = (jax.random.normal(key, (din, dout), jnp.float32) * 0.02).astype(MATMUL_DTYPE)
    return w, jnp.zeros((dout,), jnp.float32)


def _attn_params(key, d_model, kind):
    """kind='self' -> fused QKV weight; kind='cross' -> separate Q plus fused KV."""
    ks = jax.random.split(key, 4)
    wq, bq = _lin(ks[0], d_model, d_model)
    wk, bk = _lin(ks[1], d_model, d_model)
    wv, bv = _lin(ks[2], d_model, d_model)
    wo, bo = _lin(ks[3], d_model, d_model)
    if kind == "self":
        return dict(wqkv=jnp.concatenate([wq, wk, wv], axis=1),
                    bqkv=jnp.concatenate([bq, bk, bv]),
                    wo=wo, bo=bo)
    return dict(wq=wq, bq=bq,
                wkv=jnp.concatenate([wk, wv], axis=1),
                bkv=jnp.concatenate([bk, bv]),
                wo=wo, bo=bo)


def _ffn_params(key, d_model, hidden):
    k1, k2 = jax.random.split(key)
    w1, b1 = _lin(k1, d_model, hidden)
    w2, b2 = _lin(k2, hidden, d_model)
    return dict(w1=w1, b1=b1, w2=w2, b2=b2)


def init_params(key, src_voc, tgt_voc, max_len, d_model, hidden, num_layers):
    keys = jax.random.split(key, 8)
    pe = sinusoidal_pe(max_len, d_model)

    enc_layers = []
    for k in jax.random.split(keys[0], num_layers):
        ka, kf = jax.random.split(k)
        enc_layers.append(dict(
            attn=_attn_params(ka, d_model, "self"),
            ffn=_ffn_params(kf, d_model, hidden),
            ln1_g=jnp.ones((d_model,)), ln1_b=jnp.zeros((d_model,)),
            ln2_g=jnp.ones((d_model,)), ln2_b=jnp.zeros((d_model,)),
        ))
    encoder = dict(
        tok_emb=jax.random.normal(keys[1], (src_voc, d_model), jnp.float32) * 0.02,
        pos_emb=pe, layers=enc_layers)

    dec_layers = []
    for k in jax.random.split(keys[2], num_layers):
        ks_, kc, kf = jax.random.split(k, 3)
        dec_layers.append(dict(
            self_attn=_attn_params(ks_, d_model, "self"),
            cross_attn=_attn_params(kc, d_model, "cross"),
            ffn=_ffn_params(kf, d_model, hidden),
            ln1_g=jnp.ones((d_model,)), ln1_b=jnp.zeros((d_model,)),
            ln2_g=jnp.ones((d_model,)), ln2_b=jnp.zeros((d_model,)),
            ln3_g=jnp.ones((d_model,)), ln3_b=jnp.zeros((d_model,)),
        ))
    out_w, out_b = _lin(keys[3], d_model, tgt_voc)
    decoder = dict(
        tok_emb=jax.random.normal(keys[4], (tgt_voc, d_model), jnp.float32) * 0.02,
        pos_emb=pe, layers=dec_layers, out_w=out_w, out_b=out_b)

    return dict(encoder=encoder, decoder=decoder)


# ----------------------------------------------------------------------------
if __name__ == "__main__":
    # Small config
    SRC_PAD, TGT_PAD = 0, 0
    SRC_VOC, TGT_VOC = 57, 61
    MAX_LEN = 16
    D_MODEL = 32
    HIDDEN = 64
    NUM_HEADS = 4
    NUM_LAYERS = 2
    B, S = 2, 8

    key = jax.random.PRNGKey(0)
    k_param, k_src, k_tgt = jax.random.split(key, 3)
    params = init_params(k_param, SRC_VOC, TGT_VOC, MAX_LEN, D_MODEL, HIDDEN, NUM_LAYERS)

    src = jax.random.randint(k_src, (B, S), 1, SRC_VOC, dtype=jnp.int32)
    tgt = jax.random.randint(k_tgt, (B, S), 1, TGT_VOC, dtype=jnp.int32)
    # introduce some padding tokens to exercise the pad masks
    src = src.at[:, -2:].set(SRC_PAD)
    tgt = tgt.at[:, -1:].set(TGT_PAD)

    fwd = functools.partial(transformer_forward, num_heads=NUM_HEADS,
                            src_pad_idx=SRC_PAD, tgt_pad_idx=TGT_PAD)
    out = jax.jit(fwd)(params, src, tgt)
    out = jax.block_until_ready(out)

    assert out.shape == (B, S, TGT_VOC), out.shape
    assert bool(jnp.all(jnp.isfinite(out)))
    print("KERNEL_OK")
</pallas_src>

<mosaic_0001>
module attributes {stable_mosaic.version = 11 : i64} {
  func.func @_matmul_kernel(%arg0: i32, %arg1: i32, %arg2: i32, %arg3: memref<16x32xf32, #tpu.memory_space<vmem>>, %arg4: memref<32x96xbf16, #tpu.memory_space<vmem>>, %arg5: memref<1x96xf32, #tpu.memory_space<vmem>>, %arg6: memref<16x96xf32, #tpu.memory_space<vmem>>, %arg7: memref<16x96xf32, #tpu.memory_space<vmem>>) attributes {dimension_semantics = [#tpu.dimension_semantics<parallel>, #tpu.dimension_semantics<parallel>, #tpu.dimension_semantics<arbitrary>], iteration_bounds = array<i64: 1, 1, 1>, scalar_prefetch = 0 : i64, scratch_operands = 1 : i64, tpu.core_type = #tpu.core_type<tc>, window_params = [{transform_indices = @transform_0, window_bounds = array<i64: 16, 32>}, {transform_indices = @transform_1, window_bounds = array<i64: 32, 96>}, {transform_indices = @transform_2, window_bounds = array<i64: 1, 96>}, {transform_indices = @transform_3, window_bounds = array<i64: 16, 96>}]} {
    %c0_i32 = arith.constant 0 : i32
    %0 = arith.cmpi eq, %arg2, %c0_i32 : i32
    %1 = arith.extui %0 : i1 to i32
    %c0_i32_0 = arith.constant 0 : i32
    %2 = arith.cmpi ne, %1, %c0_i32_0 : i32
    scf.if %2 {
      %cst_10 = arith.constant 0.000000e+00 : f32
      %13 = vector.broadcast %cst_10 : f32 to vector<16x96xf32>
      %c0_11 = arith.constant 0 : index
      %c0_12 = arith.constant 0 : index
      %14 = vector.load %arg7[%c0_11, %c0_12] : memref<16x96xf32, #tpu.memory_space<vmem>>, vector<16x96xf32>
      tpu.vector_store %arg7[%c0_11, %c0_12], %13 {strides = array<i32>} : memref<16x96xf32, #tpu.memory_space<vmem>>, vector<16x96xf32>,
    } else {
    }
    %c0 = arith.constant 0 : index
    %c0_1 = arith.constant 0 : index
    %3 = vector.load %arg7[%c0, %c0_1] : memref<16x96xf32, #tpu.memory_space<vmem>>, vector<16x96xf32>
    %c0_2 = arith.constant 0 : index
    %c0_3 = arith.constant 0 : index
    %4 = vector.load %arg3[%c0_2, %c0_3] : memref<16x32xf32, #tpu.memory_space<vmem>>, vector<16x32xf32>
    %5 = arith.truncf %4 : vector<16x32xf32> to vector<16x32xbf16>
    %c0_4 = arith.constant 0 : index
    %c0_5 = arith.constant 0 : index
    %6 = vector.load %arg4[%c0_4, %c0_5] : memref<32x96xbf16, #tpu.memory_space<vmem>>, vector<32x96xbf16>
    %cst = arith.constant dense<0.000000e+00> : vector<16x96xf32>
    %7 = tpu.matmul %5, %6, %cst {dimension_numbers = #tpu.dot_dimension_numbers<[1], [0], [0], [1], [0, 0, 1, 1], [], []>} : vector<16x32xbf16>, vector<32x96xbf16>, vector<16x96xf32> -> vector<16x96xf32>
    %8 = arith.addf %3, %7 : vector<16x96xf32>
    %c0_6 = arith.constant 0 : index
    %c0_7 = arith.constant 0 : index
    %9 = vector.load %arg7[%c0_6, %c0_7] : memref<16x96xf32, #tpu.memory_space<vmem>>, vector<16x96xf32>
    tpu.vector_store %arg7[%c0_6, %c0_7], %8 {strides = array<i32>} : memref<16x96xf32, #tpu.memory_space<vmem>>, vector<16x96xf32>,
    %c0_i32_8 = arith.constant 0 : i32
    %10 = arith.cmpi eq, %arg2, %c0_i32_8 : i32
    %11 = arith.extui %10 : i1 to i32
    %c0_i32_9 = arith.constant 0 : i32
    %12 = arith.cmpi ne, %11, %c0_i32_9 : i32
    scf.if %12 {
      %c0_10 = arith.constant 0 : index
      %c0_11 = arith.constant 0 : index
      %13 = vector.load %arg7[%c0_10, %c0_11] : memref<16x96xf32, #tpu.memory_space<vmem>>, vector<16x96xf32>
      %c0_12 = arith.constant 0 : index
      %c0_13 = arith.constant 0 : index
      %14 = vector.load %arg5[%c0_12, %c0_13] : memref<1x96xf32, #tpu.memory_space<vmem>>, vector<1x96xf32>
      %15 = vector.broadcast %14 : vector<1x96xf32> to vector<16x96xf32>
      %16 = arith.addf %13, %15 : vector<16x96xf32>
      %c0_14 = arith.constant 0 : index
      %c0_15 = arith.constant 0 : index
      %17 = vector.load %arg6[%c0_14, %c0_15] : memref<16x96xf32, #tpu.memory_space<vmem>>, vector<16x96xf32>
      tpu.vector_store %arg6[%c0_14, %c0_15], %16 {strides = array<i32>} : memref<16x96xf32, #tpu.memory_space<vmem>>, vector<16x96xf32>,
    } else {
    }
    return
  }
  func.func @transform_0(%arg0: i32, %arg1: i32, %arg2: i32) -> (i32, i32) {
    %c0_i32 = arith.constant 0 : i32
    return %arg0, %arg2 : i32, i32
  }
  func.func @transform_1(%arg0: i32, %arg1: i32, %arg2: i32) -> (i32, i32) {
    %c0_i32 = arith.constant 0 : i32
    return %arg2, %arg1 : i32, i32
  }
  func.func @transform_2(%arg0: i32, %arg1: i32, %arg2: i32) -> (i32, i32) {
    %c0_i32 = arith.constant 0 : i32
    %c0_i32_0 = arith.constant 0 : i32
    return %c0_i32, %arg1 : i32, i32
  }
  func.func @transform_3(%arg0: i32, %arg1: i32, %arg2: i32) -> (i32, i32) {
    %c0_i32 = arith.constant 0 : i32
    return %arg0, %arg1 : i32, i32
  }
}

module attributes {stable_mosaic.version = 11 : i64} {
  func.func @_attn_kernel(%arg0: i32, %arg1: memref<1x4x8x8xf32, #tpu.memory_space<vmem>>, %arg2: memref<1x4x8x8xf32, #tpu.memory_space<vmem>>, %arg3: memref<1x4x8x8xf32, #tpu.memory_space<vmem>>, %arg4: memref<1x8x8xf32, #tpu.memory_space<vmem>>, %arg5: memref<1x4x8x8xf32, #tpu.memory_space<vmem>>) attributes {dimension_semantics = [#tpu.dimension_semantics<parallel>], iteration_bounds = array<i64: 2>, scalar_prefetch = 0 : i64, scratch_operands = 0 : i64, tpu.core_type = #tpu.core_type<tc>, window_params = [{transform_indices = @transform_0, window_bounds = array<i64: 1, 4, 8, 8>}, {transform_indices = @transform_1, window_bounds = array<i64: 1, 4, 8, 8>}, {transform_indices = @transform_2, window_bounds = array<i64: 1, 4, 8, 8>}, {transform_indices = @transform_3, window_bounds = array<i64: 1, 8, 8>}, {transform_indices = @transform_4, window_bounds = array<i64: 1, 4, 8, 8>}]} {
    %c0 = arith.constant 0 : index
    %c0_0 = arith.constant 0 : index
    %c0_1 = arith.constant 0 : index
    %c0_2 = arith.constant 0 : index
    %0 = vector.load %arg1[%c0, %c0_0, %c0_1, %c0_2] : memref<1x4x8x8xf32, #tpu.memory_space<vmem>>, vector<1x4x8x8xf32>
    %1 = vector.shape_cast %0 : vector<1x4x8x8xf32> to vector<4x8x8xf32>
    %2 = arith.truncf %1 : vector<4x8x8xf32> to vector<4x8x8xbf16>
    %c0_3 = arith.constant 0 : index
    %c0_4 = arith.constant 0 : index
    %c0_5 = arith.constant 0 : index
    %c0_6 = arith.constant 0 : index
    %3 = vector.load %arg2[%c0_3, %c0_4, %c0_5, %c0_6] : memref<1x4x8x8xf32, #tpu.memory_space<vmem>>, vector<1x4x8x8xf32>
    %4 = vector.shape_cast %3 : vector<1x4x8x8xf32> to vector<4x8x8xf32>
    %5 = arith.truncf %4 : vector<4x8x8xf32> to vector<4x8x8xbf16>
    %c0_7 = arith.constant 0 : index
    %c0_8 = arith.constant 0 : index
    %c0_9 = arith.constant 0 : index
    %c0_10 = arith.constant 0 : index
    %6 = vector.load %arg3[%c0_7, %c0_8, %c0_9, %c0_10] : memref<1x4x8x8xf32, #tpu.memory_space<vmem>>, vector<1x4x8x8xf32>
    %7 = vector.shape_cast %6 : vector<1x4x8x8xf32> to vector<4x8x8xf32>
    %8 = arith.truncf %7 : vector<4x8x8xf32> to vector<4x8x8xbf16>
    %c0_11 = arith.constant 0 : index
    %c0_12 = arith.constant 0 : index
    %c0_13 = arith.constant 0 : index
    %9 = vector.load %arg4[%c0_11, %c0_12, %c0_13] : memref<1x8x8xf32, #tpu.memory_space<vmem>>, vector<1x8x8xf32>
    %10 = vector.shape_cast %9 : vector<1x8x8xf32> to vector<8x8xf32>
    "tpu.trace_start"() <{level = 10 : i32, message = "hqd,hkd->hqk"}> : () -> ()
    %cst = arith.constant dense<0.000000e+00> : vector<4x8x8xf32>
    %11 = tpu.matmul %2, %5, %cst {dimension_numbers = #tpu.dot_dimension_numbers<[2], [2], [1], [1], [0, 0, 0, 1, 1, 1], [0], [0]>} : vector<4x8x8xbf16>, vector<4x8x8xbf16>, vector<4x8x8xf32> -> vector<4x8x8xf32>
    "tpu.trace_stop"() : () -> ()
    %cst_14 = arith.constant 0.353553385 : f32
    %12 = vector.broadcast %cst_14 : f32 to vector<4x8x8xf32>
    %13 = arith.mulf %11, %12 : vector<4x8x8xf32>
    %14 = vector.shape_cast %10 : vector<8x8xf32> to vector<1x8x8xf32>
    %cst_15 = arith.constant 5.000000e-01 : f32
    %15 = vector.broadcast %cst_15 : f32 to vector<1x8x8xf32>
    %16 = arith.cmpf ogt, %14, %15 : vector<1x8x8xf32>
    %cst_16 = arith.constant -1.000000e+04 : f32
    %17 = vector.shape_cast %16 : vector<1x8x8xi1> to vector<1x8x8xi1>
    %18 = vector.broadcast %17 : vector<1x8x8xi1> to vector<4x8x8xi1>
    %19 = vector.broadcast %cst_16 : f32 to vector<4x8x8xf32>
    %20 = arith.select %18, %13, %19 : vector<4x8x8xi1>, vector<4x8x8xf32>
    %cst_17 = arith.constant dense<0xFF800000> : vector<4x8xf32>
    %21 = vector.multi_reduction <maximumf>, %20, %cst_17 [2] : vector<4x8x8xf32> to vector<4x8xf32>
    %22 = vector.shape_cast %21 : vector<4x8xf32> to vector<4x8x1xf32>
    %23 = vector.broadcast %22 : vector<4x8x1xf32> to vector<4x8x8xf32>
    %24 = arith.subf %20, %23 : vector<4x8x8xf32>
    %25 = math.exp %24 : vector<4x8x8xf32>
    %cst_18 = arith.constant dense<0.000000e+00> : vector<4x8xf32>
    %26 = vector.multi_reduction <add>, %25, %cst_18 [2] : vector<4x8x8xf32> to vector<4x8xf32>
    %27 = vector.shape_cast %26 : vector<4x8xf32> to vector<4x8x1xf32>
    %28 = tpu.reciprocal %27 {approx = true} : vector<4x8x1xf32> -> vector<4x8x1xf32>
    %29 = vector.broadcast %28 : vector<4x8x1xf32> to vector<4x8x8xf32>
    %30 = arith.mulf %25, %29 : vector<4x8x8xf32>
    %31 = arith.truncf %30 : vector<4x8x8xf32> to vector<4x8x8xbf16>
    "tpu.trace_start"() <{level = 10 : i32, message = "hqk,hkd->hqd"}> : () -> ()
    %cst_19 = arith.constant dense<0.000000e+00> : vector<4x8x8xf32>
    %32 = tpu.matmul %31, %8, %cst_19 {dimension_numbers = #tpu.dot_dimension_numbers<[2], [1], [1], [2], [0, 0, 0, 1, 1, 2], [0], [0]>} : vector<4x8x8xbf16>, vector<4x8x8xbf16>, vector<4x8x8xf32> -> vector<4x8x8xf32>
    "tpu.trace_stop"() : () -> ()
    %c0_20 = arith.constant 0 : index
    %c0_21 = arith.constant 0 : index
    %c0_22 = arith.constant 0 : index
    %c0_23 = arith.constant 0 : index
    %33 = vector.load %arg5[%c0_20, %c0_21, %c0_22, %c0_23] : memref<1x4x8x8xf32, #tpu.memory_space<vmem>>, vector<1x4x8x8xf32>
    %34 = vector.shape_cast %33 : vector<1x4x8x8xf32> to vector<4x8x8xf32>
    %35 = vector.shape_cast %32 : vector<4x8x8xf32> to vector<1x4x8x8xf32>
    tpu.vector_store %arg5[%c0_20, %c0_21, %c0_22, %c0_23], %35 {strides = array<i32>} : memref<1x4x8x8xf32, #tpu.memory_space<vmem>>, vector<1x4x8x8xf32>,
    return
  }
  func.func @transform_0(%arg0: i32) -> (i32, i32, i32, i32) {
    %c0_i32 = arith.constant 0 : i32
    %c0_i32_0 = arith.constant 0 : i32
    %c0_i32_1 = arith.constant 0 : i32
    %c0_i32_2 = arith.constant 0 : i32
    return %arg0, %c0_i32, %c0_i32_0, %c0_i32_1 : i32, i32, i32, i32
  }
  func.func @transform_1(%arg0: i32) -> (i32, i32, i32, i32) {
    %c0_i32 = arith.constant 0 : i32
    %c0_i32_0 = arith.constant 0 : i32
    %c0_i32_1 = arith.constant 0 : i32
    %c0_i32_2 = arith.constant 0 : i32
    return %arg0, %c0_i32, %c0_i32_0, %c0_i32_1 : i32, i32, i32, i32
  }
  func.func @transform_2(%arg0: i32) -> (i32, i32, i32, i32) {
    %c0_i32 = arith.constant 0 : i32
    %c0_i32_0 = arith.constant 0 : i32
    %c0_i32_1 = arith.constant 0 : i32
    %c0_i32_2 = arith.constant 0 : i32
    return %arg0, %c0_i32, %c0_i32_0, %c0_i32_1 : i32, i32, i32, i32
  }
  func.func @transform_3(%arg0: i32) -> (i32, i32, i32) {
    %c0_i32 = arith.constant 0 : i32
    %c0_i32_0 = arith.constant 0 : i32
    %c0_i32_1 = arith.constant 0 : i32
    return %arg0, %c0_i32, %c0_i32_0 : i32, i32, i32
  }
  func.func @transform_4(%arg0: i32) -> (i32, i32, i32, i32) {
    %c0_i32 = arith.constant 0 : i32
    %c0_i32_0 = arith.constant 0 : i32
    %c0_i32_1 = arith.constant 0 : i32
    %c0_i32_2 = arith.constant 0 : i32
    return %arg0, %c0_i32, %c0_i32_0, %c0_i32_1 : i32, i32, i32, i32
  }
}

module attributes {stable_mosaic.version = 11 : i64} {
  func.func @_matmul_add_ln_kernel(%arg0: i32, %arg1: i32, %arg2: memref<16x32xf32, #tpu.memory_space<vmem>>, %arg3: memref<32x32xbf16, #tpu.memory_space<vmem>>, %arg4: memref<1x32xf32, #tpu.memory_space<vmem>>, %arg5: memref<16x32xf32, #tpu.memory_space<vmem>>, %arg6: memref<1x32xf32, #tpu.memory_space<vmem>>, %arg7: memref<1x32xf32, #tpu.memory_space<vmem>>, %arg8: memref<16x32xf32, #tpu.memory_space<vmem>>, %arg9: memref<16x32xf32, #tpu.memory_space<vmem>>) attributes {dimension_semantics = [#tpu.dimension_semantics<parallel>, #tpu.dimension_semantics<arbitrary>], iteration_bounds = array<i64: 1, 1>, scalar_prefetch = 0 : i64, scratch_operands = 1 : i64, tpu.core_type = #tpu.core_type<tc>, window_params = [{transform_indices = @transform_0, window_bounds = array<i64: 16, 32>}, {transform_indices = @transform_1, window_bounds = array<i64: 32, 32>}, {pipeline_mode = #tpu.pipeline_mode<synchronous>, transform_indices = @transform_2, window_bounds = array<i64: 1, 32>}, {transform_indices = @transform_3, window_bounds = array<i64: 16, 32>}, {pipeline_mode = #tpu.pipeline_mode<synchronous>, transform_indices = @transform_4, window_bounds = array<i64: 1, 32>}, {pipeline_mode = #tpu.pipeline_mode<synchronous>, transform_indices = @transform_5, window_bounds = array<i64: 1, 32>}, {transform_indices = @transform_6, window_bounds = array<i64: 16, 32>}]} {
    %c0_i32 = arith.constant 0 : i32
    %0 = arith.cmpi eq, %arg1, %c0_i32 : i32
    %1 = arith.extui %0 : i1 to i32
    %c0_i32_0 = arith.constant 0 : i32
    %2 = arith.cmpi ne, %1, %c0_i32_0 : i32
    scf.if %2 {
      %cst_10 = arith.constant 0.000000e+00 : f32
      %13 = vector.broadcast %cst_10 : f32 to vector<16x32xf32>
      %c0_11 = arith.constant 0 : index
      %c0_12 = arith.constant 0 : index
      %14 = vector.load %arg9[%c0_11, %c0_12] : memref<16x32xf32, #tpu.memory_space<vmem>>, vector<16x32xf32>
      tpu.vector_store %arg9[%c0_11, %c0_12], %13 {strides = array<i32>} : memref<16x32xf32, #tpu.memory_space<vmem>>, vector<16x32xf32>,
    } else {
    }
    %c0 = arith.constant 0 : index
    %c0_1 = arith.constant 0 : index
    %3 = vector.load %arg9[%c0, %c0_1] : memref<16x32xf32, #tpu.memory_space<vmem>>, vector<16x32xf32>
    %c0_2 = arith.constant 0 : index
    %c0_3 = arith.constant 0 : index
    %4 = vector.load %arg2[%c0_2, %c0_3] : memref<16x32xf32, #tpu.memory_space<vmem>>, vector<16x32xf32>
    %5 = arith.truncf %4 : vector<16x32xf32> to vector<16x32xbf16>
    %c0_4 = arith.constant 0 : index
    %c0_5 = arith.constant 0 : index
    %6 = vector.load %arg3[%c0_4, %c0_5] : memref<32x32xbf16, #tpu.memory_space<vmem>>, vector<32x32xbf16>
    %cst = arith.constant dense<0.000000e+00> : vector<16x32xf32>
    %7 = tpu.matmul %5, %6, %cst {dimension_numbers = #tpu.dot_dimension_numbers<[1], [0], [0], [1], [0, 0, 1, 1], [], []>} : vector<16x32xbf16>, vector<32x32xbf16>, vector<16x32xf32> -> vector<16x32xf32>
    %8 = arith.addf %3, %7 : vector<16x32xf32>
    %c0_6 = arith.constant 0 : index
    %c0_7 = arith.constant 0 : index
    %9 = vector.load %arg9[%c0_6, %c0_7] : memref<16x32xf32, #tpu.memory_space<vmem>>, vector<16x32xf32>
    tpu.vector_store %arg9[%c0_6, %c0_7], %8 {strides = array<i32>} : memref<16x32xf32, #tpu.memory_space<vmem>>, vector<16x32xf32>,
    %c0_i32_8 = arith.constant 0 : i32
    %10 = arith.cmpi eq, %arg1, %c0_i32_8 : i32
    %11 = arith.extui %10 : i1 to i32
    %c0_i32_9 = arith.constant 0 : i32
    %12 = arith.cmpi ne, %11, %c0_i32_9 : i32
    scf.if %12 {
      %c0_10 = arith.constant 0 : index
      %c0_11 = arith.constant 0 : index
      %13 = vector.load %arg9[%c0_10, %c0_11] : memref<16x32xf32, #tpu.memory_space<vmem>>, vector<16x32xf32>
      %c0_12 = arith.constant 0 : index
      %c0_13 = arith.constant 0 : index
      %14 = vector.load %arg4[%c0_12, %c0_13] : memref<1x32xf32, #tpu.memory_space<vmem>>, vector<1x32xf32>
      %15 = vector.broadcast %14 : vector<1x32xf32> to vector<16x32xf32>
      %16 = arith.addf %13, %15 : vector<16x32xf32>
      %c0_14 = arith.constant 0 : index
      %c0_15 = arith.constant 0 : index
      %17 = vector.load %arg5[%c0_14, %c0_15] : memref<16x32xf32, #tpu.memory_space<vmem>>, vector<16x32xf32>
      %18 = arith.addf %16, %17 : vector<16x32xf32>
      %cst_16 = arith.constant dense<0.000000e+00> : vector<16xf32>
      %19 = vector.multi_reduction <add>, %18, %cst_16 [1] : vector<16x32xf32> to vector<16xf32>
      %20 = vector.shape_cast %19 : vector<16xf32> to vector<16x1xf32>
      %cst_17 = arith.constant 3.200000e+01 : f32
      %21 = vector.broadcast %cst_17 : f32 to vector<16x1xf32>
      %22 = arith.divf %20, %21 : vector<16x1xf32>
      %23 = vector.broadcast %22 : vector<16x1xf32> to vector<16x32xf32>
      %24 = arith.subf %18, %23 : vector<16x32xf32>
      %25 = arith.mulf %24, %24 : vector<16x32xf32>
      %cst_18 = arith.constant dense<0.000000e+00> : vector<16xf32>
      %26 = vector.multi_reduction <add>, %25, %cst_18 [1] : vector<16x32xf32> to vector<16xf32>
      %27 = vector.shape_cast %26 : vector<16xf32> to vector<16x1xf32>
      %cst_19 = arith.constant 3.200000e+01 : f32
      %28 = vector.broadcast %cst_19 : f32 to vector<16x1xf32>
      %29 = arith.divf %27, %28 : vector<16x1xf32>
      %30 = vector.broadcast %22 : vector<16x1xf32> to vector<16x32xf32>
      %31 = arith.subf %18, %30 : vector<16x32xf32>
      %cst_20 = arith.constant 9.99999996E-13 : f32
      %32 = vector.broadcast %cst_20 : f32 to vector<16x1xf32>
      %33 = arith.addf %29, %32 : vector<16x1xf32>
      %34 = math.rsqrt %33 : vector<16x1xf32>
      %35 = vector.broadcast %34 : vector<16x1xf32> to vector<16x32xf32>
      %36 = arith.mulf %31, %35 : vector<16x32xf32>
      %c0_21 = arith.constant 0 : index
      %c0_22 = arith.constant 0 : index
      %37 = vector.load %arg6[%c0_21, %c0_22] : memref<1x32xf32, #tpu.memory_space<vmem>>, vector<1x32xf32>
      %38 = vector.broadcast %37 : vector<1x32xf32> to vector<16x32xf32>
      %39 = arith.mulf %36, %38 : vector<16x32xf32>
      %c0_23 = arith.constant 0 : index
      %c0_24 = arith.constant 0 : index
      %40 = vector.load %arg7[%c0_23, %c0_24] : memref<1x32xf32, #tpu.memory_space<vmem>>, vector<1x32xf32>
      %41 = vector.broadcast %40 : vector<1x32xf32> to vector<16x32xf32>
      %42 = arith.addf %39, %41 : vector<16x32xf32>
      %c0_25 = arith.constant 0 : index
      %c0_26 = arith.constant 0 : index
      %43 = vector.load %arg8[%c0_25, %c0_26] : memref<16x32xf32, #tpu.memory_space<vmem>>, vector<16x32xf32>
      tpu.vector_store %arg8[%c0_25, %c0_26], %42 {strides = array<i32>} : memref<16x32xf32, #tpu.memory_space<vmem>>, vector<16x32xf32>,
    } else {
    }
    return
  }
  func.func @transform_0(%arg0: i32, %arg1: i32) -> (i32, i32) {
    %c0_i32 = arith.constant 0 : i32
    return %arg0, %arg1 : i32, i32
  }
  func.func @transform_1(%arg0: i32, %arg1: i32) -> (i32, i32) {
    %c0_i32 = arith.constant 0 : i32
    %c0_i32_0 = arith.constant 0 : i32
    return %arg1, %c0_i32 : i32, i32
  }
  func.func @transform_2(%arg0: i32, %arg1: i32) -> (i32, i32) {
    %c0_i32 = arith.constant 0 : i32
    %c0_i32_0 = arith.constant 0 : i32
    %c0_i32_1 = arith.constant 0 : i32
    return %c0_i32, %c0_i32_0 : i32, i32
  }
  func.func @transform_3(%arg0: i32, %arg1: i32) -> (i32, i32) {
    %c0_i32 = arith.constant 0 : i32
    %c0_i32_0 = arith.constant 0 : i32
    return %arg0, %c0_i32 : i32, i32
  }
  func.func @transform_4(%arg0: i32, %arg1: i32) -> (i32, i32) {
    %c0_i32 = arith.constant 0 : i32
    %c0_i32_0 = arith.constant 0 : i32
    %c0_i32_1 = arith.constant 0 : i32
    return %c0_i32, %c0_i32_0 : i32, i32
  }
  func.func @transform_5(%arg0: i32, %arg1: i32) -> (i32, i32) {
    %c0_i32 = arith.constant 0 : i32
    %c0_i32_0 = arith.constant 0 : i32
    %c0_i32_1 = arith.constant 0 : i32
    return %c0_i32, %c0_i32_0 : i32, i32
  }
  func.func @transform_6(%arg0: i32, %arg1: i32) -> (i32, i32) {
    %c0_i32 = arith.constant 0 : i32
    %c0_i32_0 = arith.constant 0 : i32
    return %arg0, %c0_i32 : i32, i32
  }
}

module attributes {stable_mosaic.version = 11 : i64} {
  func.func @_matmul_kernel(%arg0: i32, %arg1: i32, %arg2: i32, %arg3: memref<16x32xf32, #tpu.memory_space<vmem>>, %arg4: memref<32x32xbf16, #tpu.memory_space<vmem>>, %arg5: memref<1x32xf32, #tpu.memory_space<vmem>>, %arg6: memref<16x32xf32, #tpu.memory_space<vmem>>, %arg7: memref<16x32xf32, #tpu.memory_space<vmem>>) attributes {dimension_semantics = [#tpu.dimension_semantics<parallel>, #tpu.dimension_semantics<parallel>, #tpu.dimension_semantics<arbitrary>], iteration_bounds = array<i64: 1, 1, 1>, scalar_prefetch = 0 : i64, scratch_operands = 1 : i64, tpu.core_type = #tpu.core_type<tc>, window_params = [{transform_indices = @transform_0, window_bounds = array<i64: 16, 32>}, {transform_indices = @transform_1, window_bounds = array<i64: 32, 32>}, {transform_indices = @transform_2, window_bounds = array<i64: 1, 32>}, {transform_indices = @transform_3, window_bounds = array<i64: 16, 32>}]} {
    %c0_i32 = arith.constant 0 : i32
    %0 = arith.cmpi eq, %arg2, %c0_i32 : i32
    %1 = arith.extui %0 : i1 to i32
    %c0_i32_0 = arith.constant 0 : i32
    %2 = arith.cmpi ne, %1, %c0_i32_0 : i32
    scf.if %2 {
      %cst_10 = arith.constant 0.000000e+00 : f32
      %13 = vector.broadcast %cst_10 : f32 to vector<16x32xf32>
      %c0_11 = arith.constant 0 : index
      %c0_12 = arith.constant 0 : index
      %14 = vector.load %arg7[%c0_11, %c0_12] : memref<16x32xf32, #tpu.memory_space<vmem>>, vector<16x32xf32>
      tpu.vector_store %arg7[%c0_11, %c0_12], %13 {strides = array<i32>} : memref<16x32xf32, #tpu.memory_space<vmem>>, vector<16x32xf32>,
    } else {
    }
    %c0 = arith.constant 0 : index
    %c0_1 = arith.constant 0 : index
    %3 = vector.load %arg7[%c0, %c0_1] : memref<16x32xf32, #tpu.memory_space<vmem>>, vector<16x32xf32>
    %c0_2 = arith.constant 0 : index
    %c0_3 = arith.constant 0 : index
    %4 = vector.load %arg3[%c0_2, %c0_3] : memref<16x32xf32, #tpu.memory_space<vmem>>, vector<16x32xf32>
    %5 = arith.truncf %4 : vector<16x32xf32> to vector<16x32xbf16>
    %c0_4 = arith.constant 0 : index
    %c0_5 = arith.constant 0 : index
    %6 = vector.load %arg4[%c0_4, %c0_5] : memref<32x32xbf16, #tpu.memory_space<vmem>>, vector<32x32xbf16>
    %cst = arith.constant dense<0.000000e+00> : vector<16x32xf32>
    %7 = tpu.matmul %5, %6, %cst {dimension_numbers = #tpu.dot_dimension_numbers<[1], [0], [0], [1], [0, 0, 1, 1], [], []>} : vector<16x32xbf16>, vector<32x32xbf16>, vector<16x32xf32> -> vector<16x32xf32>
    %8 = arith.addf %3, %7 : vector<16x32xf32>
    %c0_6 = arith.constant 0 : index
    %c0_7 = arith.constant 0 : index
    %9 = vector.load %arg7[%c0_6, %c0_7] : memref<16x32xf32, #tpu.memory_space<vmem>>, vector<16x32xf32>
    tpu.vector_store %arg7[%c0_6, %c0_7], %8 {strides = array<i32>} : memref<16x32xf32, #tpu.memory_space<vmem>>, vector<16x32xf32>,
    %c0_i32_8 = arith.constant 0 : i32
    %10 = arith.cmpi eq, %arg2, %c0_i32_8 : i32
    %11 = arith.extui %10 : i1 to i32
    %c0_i32_9 = arith.constant 0 : i32
    %12 = arith.cmpi ne, %11, %c0_i32_9 : i32
    scf.if %12 {
      %c0_10 = arith.constant 0 : index
      %c0_11 = arith.constant 0 : index
      %13 = vector.load %arg7[%c0_10, %c0_11] : memref<16x32xf32, #tpu.memory_space<vmem>>, vector<16x32xf32>
      %c0_12 = arith.constant 0 : index
      %c0_13 = arith.constant 0 : index
      %14 = vector.load %arg5[%c0_12, %c0_13] : memref<1x32xf32, #tpu.memory_space<vmem>>, vector<1x32xf32>
      %15 = vector.broadcast %14 : vector<1x32xf32> to vector<16x32xf32>
      %16 = arith.addf %13, %15 : vector<16x32xf32>
      %c0_14 = arith.constant 0 : index
      %c0_15 = arith.constant 0 : index
      %17 = vector.load %arg6[%c0_14, %c0_15] : memref<16x32xf32, #tpu.memory_space<vmem>>, vector<16x32xf32>
      tpu.vector_store %arg6[%c0_14, %c0_15], %16 {strides = array<i32>} : memref<16x32xf32, #tpu.memory_space<vmem>>, vector<16x32xf32>,
    } else {
    }
    return
  }
  func.func @transform_0(%arg0: i32, %arg1: i32, %arg2: i32) -> (i32, i32) {
    %c0_i32 = arith.constant 0 : i32
    return %arg0, %arg2 : i32, i32
  }
  func.func @transform_1(%arg0: i32, %arg1: i32, %arg2: i32) -> (i32, i32) {
    %c0_i32 = arith.constant 0 : i32
    return %arg2, %arg1 : i32, i32
  }
  func.func @transform_2(%arg0: i32, %arg1: i32, %arg2: i32) -> (i32, i32) {
    %c0_i32 = arith.constant 0 : i32
    %c0_i32_0 = arith.constant 0 : i32
    return %c0_i32, %arg1 : i32, i32
  }
  func.func @transform_3(%arg0: i32, %arg1: i32, %arg2: i32) -> (i32, i32) {
    %c0_i32 = arith.constant 0 : i32
    return %arg0, %arg1 : i32, i32
  }
}

module attributes {stable_mosaic.version = 11 : i64} {
  func.func @_ffn_add_ln_kernel(%arg0: i32, %arg1: i32, %arg2: memref<16x32xf32, #tpu.memory_space<vmem>>, %arg3: memref<32x64xbf16, #tpu.memory_space<vmem>>, %arg4: memref<1x64xf32, #tpu.memory_space<vmem>>, %arg5: memref<64x32xbf16, #tpu.memory_space<vmem>>, %arg6: memref<1x32xf32, #tpu.memory_space<vmem>>, %arg7: memref<16x32xf32, #tpu.memory_space<vmem>>, %arg8: memref<1x32xf32, #tpu.memory_space<vmem>>, %arg9: memref<1x32xf32, #tpu.memory_space<vmem>>, %arg10: memref<16x32xf32, #tpu.memory_space<vmem>>, %arg11: memref<16x32xf32, #tpu.memory_space<vmem>>) attributes {dimension_semantics = [#tpu.dimension_semantics<parallel>, #tpu.dimension_semantics<arbitrary>], iteration_bounds = array<i64: 1, 1>, scalar_prefetch = 0 : i64, scratch_operands = 1 : i64, tpu.core_type = #tpu.core_type<tc>, window_params = [{transform_indices = @transform_0, window_bounds = array<i64: 16, 32>}, {transform_indices = @transform_1, window_bounds = array<i64: 32, 64>}, {transform_indices = @transform_2, window_bounds = array<i64: 1, 64>}, {transform_indices = @transform_3, window_bounds = array<i64: 64, 32>}, {pipeline_mode = #tpu.pipeline_mode<synchronous>, transform_indices = @transform_4, window_bounds = array<i64: 1, 32>}, {transform_indices = @transform_5, window_bounds = array<i64: 16, 32>}, {pipeline_mode = #tpu.pipeline_mode<synchronous>, transform_indices = @transform_6, window_bounds = array<i64: 1, 32>}, {pipeline_mode = #tpu.pipeline_mode<synchronous>, transform_indices = @transform_7, window_bounds = array<i64: 1, 32>}, {transform_indices = @transform_8, window_bounds = array<i64: 16, 32>}]} {
    %c0_i32 = arith.constant 0 : i32
    %0 = arith.cmpi eq, %arg1, %c0_i32 : i32
    %1 = arith.extui %0 : i1 to i32
    %c0_i32_0 = arith.constant 0 : i32
    %2 = arith.cmpi ne, %1, %c0_i32_0 : i32
    scf.if %2 {
      %cst_16 = arith.constant 0.000000e+00 : f32
      %21 = vector.broadcast %cst_16 : f32 to vector<16x32xf32>
      %c0_17 = arith.constant 0 : index
      %c0_18 = arith.constant 0 : index
      %22 = vector.load %arg11[%c0_17, %c0_18] : memref<16x32xf32, #tpu.memory_space<vmem>>, vector<16x32xf32>
      tpu.vector_store %arg11[%c0_17, %c0_18], %21 {strides = array<i32>} : memref<16x32xf32, #tpu.memory_space<vmem>>, vector<16x32xf32>,
    } else {
    }
    %c0 = arith.constant 0 : index
    %c0_1 = arith.constant 0 : index
    %3 = vector.load %arg2[%c0, %c0_1] : memref<16x32xf32, #tpu.memory_space<vmem>>, vector<16x32xf32>
    %4 = arith.truncf %3 : vector<16x32xf32> to vector<16x32xbf16>
    %c0_2 = arith.constant 0 : index
    %c0_3 = arith.constant 0 : index
    %5 = vector.load %arg3[%c0_2, %c0_3] : memref<32x64xbf16, #tpu.memory_space<vmem>>, vector<32x64xbf16>
    %cst = arith.constant dense<0.000000e+00> : vector<16x64xf32>
    %6 = tpu.matmul %4, %5, %cst {dimension_numbers = #tpu.dot_dimension_numbers<[1], [0], [0], [1], [0, 0, 1, 1], [], []>} : vector<16x32xbf16>, vector<32x64xbf16>, vector<16x64xf32> -> vector<16x64xf32>
    %c0_4 = arith.constant 0 : index
    %c0_5 = arith.constant 0 : index
    %7 = vector.load %arg4[%c0_4, %c0_5] : memref<1x64xf32, #tpu.memory_space<vmem>>, vector<1x64xf32>
    %8 = vector.broadcast %7 : vector<1x64xf32> to vector<16x64xf32>
    %9 = arith.addf %6, %8 : vector<16x64xf32>
    %cst_6 = arith.constant 0.000000e+00 : f32
    %10 = vector.broadcast %cst_6 : f32 to vector<16x64xf32>
    %11 = arith.maximumf %9, %10 : vector<16x64xf32>
    %c0_7 = arith.constant 0 : index
    %c0_8 = arith.constant 0 : index
    %12 = vector.load %arg11[%c0_7, %c0_8] : memref<16x32xf32, #tpu.memory_space<vmem>>, vector<16x32xf32>
    %13 = arith.truncf %11 : vector<16x64xf32> to vector<16x64xbf16>
    %c0_9 = arith.constant 0 : index
    %c0_10 = arith.constant 0 : index
    %14 = vector.load %arg5[%c0_9, %c0_10] : memref<64x32xbf16, #tpu.memory_space<vmem>>, vector<64x32xbf16>
    %cst_11 = arith.constant dense<0.000000e+00> : vector<16x32xf32>
    %15 = tpu.matmul %13, %14, %cst_11 {dimension_numbers = #tpu.dot_dimension_numbers<[1], [0], [0], [1], [0, 0, 1, 1], [], []>} : vector<16x64xbf16>, vector<64x32xbf16>, vector<16x32xf32> -> vector<16x32xf32>
    %16 = arith.addf %12, %15 : vector<16x32xf32>
    %c0_12 = arith.constant 0 : index
    %c0_13 = arith.constant 0 : index
    %17 = vector.load %arg11[%c0_12, %c0_13] : memref<16x32xf32, #tpu.memory_space<vmem>>, vector<16x32xf32>
    tpu.vector_store %arg11[%c0_12, %c0_13], %16 {strides = array<i32>} : memref<16x32xf32, #tpu.memory_space<vmem>>, vector<16x32xf32>,
    %c0_i32_14 = arith.constant 0 : i32
    %18 = arith.cmpi eq, %arg1, %c0_i32_14 : i32
    %19 = arith.extui %18 : i1 to i32
    %c0_i32_15 = arith.constant 0 : i32
    %20 = arith.cmpi ne, %19, %c0_i32_15 : i32
    scf.if %20 {
      %c0_16 = arith.constant 0 : index
      %c0_17 = arith.constant 0 : index
      %21 = vector.load %arg11[%c0_16, %c0_17] : memref<16x32xf32, #tpu.memory_space<vmem>>, vector<16x32xf32>
      %c0_18 = arith.constant 0 : index
      %c0_19 = arith.constant 0 : index
      %22 = vector.load %arg6[%c0_18, %c0_19] : memref<1x32xf32, #tpu.memory_space<vmem>>, vector<1x32xf32>
      %23 = vector.broadcast %22 : vector<1x32xf32> to vector<16x32xf32>
      %24 = arith.addf %21, %23 : vector<16x32xf32>
      %c0_20 = arith.constant 0 : index
      %c0_21 = arith.constant 0 : index
      %25 = vector.load %arg7[%c0_20, %c0_21] : memref<16x32xf32, #tpu.memory_space<vmem>>, vector<16x32xf32>
      %26 = arith.addf %24, %25 : vector<16x32xf32>
      %cst_22 = arith.constant dense<0.000000e+00> : vector<16xf32>
      %27 = vector.multi_reduction <add>, %26, %cst_22 [1] : vector<16x32xf32> to vector<16xf32>
      %28 = vector.shape_cast %27 : vector<16xf32> to vector<16x1xf32>
      %cst_23 = arith.constant 3.200000e+01 : f32
      %29 = vector.broadcast %cst_23 : f32 to vector<16x1xf32>
      %30 = arith.divf %28, %29 : vector<16x1xf32>
      %31 = vector.broadcast %30 : vector<16x1xf32> to vector<16x32xf32>
      %32 = arith.subf %26, %31 : vector<16x32xf32>
      %33 = arith.mulf %32, %32 : vector<16x32xf32>
      %cst_24 = arith.constant dense<0.000000e+00> : vector<16xf32>
      %34 = vector.multi_reduction <add>, %33, %cst_24 [1] : vector<16x32xf32> to vector<16xf32>
      %35 = vector.shape_cast %34 : vector<16xf32> to vector<16x1xf32>
      %cst_25 = arith.constant 3.200000e+01 : f32
      %36 = vector.broadcast %cst_25 : f32 to vector<16x1xf32>
      %37 = arith.divf %35, %36 : vector<16x1xf32>
      %38 = vector.broadcast %30 : vector<16x1xf32> to vector<16x32xf32>
      %39 = arith.subf %26, %38 : vector<16x32xf32>
      %cst_26 = arith.constant 9.99999996E-13 : f32
      %40 = vector.broadcast %cst_26 : f32 to vector<16x1xf32>
      %41 = arith.addf %37, %40 : vector<16x1xf32>
      %42 = math.rsqrt %41 : vector<16x1xf32>
      %43 = vector.broadcast %42 : vector<16x1xf32> to vector<16x32xf32>
      %44 = arith.mulf %39, %43 : vector<16x32xf32>
      %c0_27 = arith.constant 0 : index
      %c0_28 = arith.constant 0 : index
      %45 = vector.load %arg8[%c0_27, %c0_28] : memref<1x32xf32, #tpu.memory_space<vmem>>, vector<1x32xf32>
      %46 = vector.broadcast %45 : vector<1x32xf32> to vector<16x32xf32>
      %47 = arith.mulf %44, %46 : vector<16x32xf32>
      %c0_29 = arith.constant 0 : index
      %c0_30 = arith.constant 0 : index
      %48 = vector.load %arg9[%c0_29, %c0_30] : memref<1x32xf32, #tpu.memory_space<vmem>>, vector<1x32xf32>
      %49 = vector.broadcast %48 : vector<1x32xf32> to vector<16x32xf32>
      %50 = arith.addf %47, %49 : vector<16x32xf32>
      %c0_31 = arith.constant 0 : index
      %c0_32 = arith.constant 0 : index
      %51 = vector.load %arg10[%c0_31, %c0_32] : memref<16x32xf32, #tpu.memory_space<vmem>>, vector<16x32xf32>
      tpu.vector_store %arg10[%c0_31, %c0_32], %50 {strides = array<i32>} : memref<16x32xf32, #tpu.memory_space<vmem>>, vector<16x32xf32>,
    } else {
    }
    return
  }
  func.func @transform_0(%arg0: i32, %arg1: i32) -> (i32, i32) {
    %c0_i32 = arith.constant 0 : i32
    %c0_i32_0 = arith.constant 0 : i32
    return %arg0, %c0_i32 : i32, i32
  }
  func.func @transform_1(%arg0: i32, %arg1: i32) -> (i32, i32) {
    %c0_i32 = arith.constant 0 : i32
    %c0_i32_0 = arith.constant 0 : i32
    return %c0_i32, %arg1 : i32, i32
  }
  func.func @transform_2(%arg0: i32, %arg1: i32) -> (i32, i32) {
    %c0_i32 = arith.constant 0 : i32
    %c0_i32_0 = arith.constant 0 : i32
    return %c0_i32, %arg1 : i32, i32
  }
  func.func @transform_3(%arg0: i32, %arg1: i32) -> (i32, i32) {
    %c0_i32 = arith.constant 0 : i32
    %c0_i32_0 = arith.constant 0 : i32
    return %arg1, %c0_i32 : i32, i32
  }
  func.func @transform_4(%arg0: i32, %arg1: i32) -> (i32, i32) {
    %c0_i32 = arith.constant 0 : i32
    %c0_i32_0 = arith.constant 0 : i32
    %c0_i32_1 = arith.constant 0 : i32
    return %c0_i32, %c0_i32_0 : i32, i32
  }
  func.func @transform_5(%arg0: i32, %arg1: i32) -> (i32, i32) {
    %c0_i32 = arith.constant 0 : i32
    %c0_i32_0 = arith.constant 0 : i32
    return %arg0, %c0_i32 : i32, i32
  }
  func.func @transform_6(%arg0: i32, %arg1: i32) -> (i32, i32) {
    %c0_i32 = arith.constant 0 : i32
    %c0_i32_0 = arith.constant 0 : i32
    %c0_i32_1 = arith.constant 0 : i32
    return %c0_i32, %c0_i32_0 : i32, i32
  }
  func.func @transform_7(%arg0: i32, %arg1: i32) -> (i32, i32) {
    %c0_i32 = arith.constant 0 : i32
    %c0_i32_0 = arith.constant 0 : i32
    %c0_i32_1 = arith.constant 0 : i32
    return %c0_i32, %c0_i32_0 : i32, i32
  }
  func.func @transform_8(%arg0: i32, %arg1: i32) -> (i32, i32) {
    %c0_i32 = arith.constant 0 : i32
    %c0_i32_0 = arith.constant 0 : i32
    return %arg0, %c0_i32 : i32, i32
  }
}

module attributes {stable_mosaic.version = 11 : i64} {
  func.func @_matmul_kernel(%arg0: i32, %arg1: i32, %arg2: i32, %arg3: memref<16x32xf32, #tpu.memory_space<vmem>>, %arg4: memref<32x64xbf16, #tpu.memory_space<vmem>>, %arg5: memref<1x64xf32, #tpu.memory_space<vmem>>, %arg6: memref<16x64xf32, #tpu.memory_space<vmem>>, %arg7: memref<16x64xf32, #tpu.memory_space<vmem>>) attributes {dimension_semantics = [#tpu.dimension_semantics<parallel>, #tpu.dimension_semantics<parallel>, #tpu.dimension_semantics<arbitrary>], iteration_bounds = array<i64: 1, 1, 1>, scalar_prefetch = 0 : i64, scratch_operands = 1 : i64, tpu.core_type = #tpu.core_type<tc>, window_params = [{transform_indices = @transform_0, window_bounds = array<i64: 16, 32>}, {transform_indices = @transform_1, window_bounds = array<i64: 32, 64>}, {transform_indices = @transform_2, window_bounds = array<i64: 1, 64>}, {transform_indices = @transform_3, window_bounds = array<i64: 16, 64>}]} {
    %c0_i32 = arith.constant 0 : i32
    %0 = arith.cmpi eq, %arg2, %c0_i32 : i32
    %1 = arith.extui %0 : i1 to i32
    %c0_i32_0 = arith.constant 0 : i32
    %2 = arith.cmpi ne, %1, %c0_i32_0 : i32
    scf.if %2 {
      %cst_10 = arith.constant 0.000000e+00 : f32
      %13 = vector.broadcast %cst_10 : f32 to vector<16x64xf32>
      %c0_11 = arith.constant 0 : index
      %c0_12 = arith.constant 0 : index
      %14 = vector.load %arg7[%c0_11, %c0_12] : memref<16x64xf32, #tpu.memory_space<vmem>>, vector<16x64xf32>
      tpu.vector_store %arg7[%c0_11, %c0_12], %13 {strides = array<i32>} : memref<16x64xf32, #tpu.memory_space<vmem>>, vector<16x64xf32>,
    } else {
    }
    %c0 = arith.constant 0 : index
    %c0_1 = arith.constant 0 : index
    %3 = vector.load %arg7[%c0, %c0_1] : memref<16x64xf32, #tpu.memory_space<vmem>>, vector<16x64xf32>
    %c0_2 = arith.constant 0 : index
    %c0_3 = arith.constant 0 : index
    %4 = vector.load %arg3[%c0_2, %c0_3] : memref<16x32xf32, #tpu.memory_space<vmem>>, vector<16x32xf32>
    %5 = arith.truncf %4 : vector<16x32xf32> to vector<16x32xbf16>
    %c0_4 = arith.constant 0 : index
    %c0_5 = arith.constant 0 : index
    %6 = vector.load %arg4[%c0_4, %c0_5] : memref<32x64xbf16, #tpu.memory_space<vmem>>, vector<32x64xbf16>
    %cst = arith.constant dense<0.000000e+00> : vector<16x64xf32>
    %7 = tpu.matmul %5, %6, %cst {dimension_numbers = #tpu.dot_dimension_numbers<[1], [0], [0], [1], [0, 0, 1, 1], [], []>} : vector<16x32xbf16>, vector<32x64xbf16>, vector<16x64xf32> -> vector<16x64xf32>
    %8 = arith.addf %3, %7 : vector<16x64xf32>
    %c0_6 = arith.constant 0 : index
    %c0_7 = arith.constant 0 : index
    %9 = vector.load %arg7[%c0_6, %c0_7] : memref<16x64xf32, #tpu.memory_space<vmem>>, vector<16x64xf32>
    tpu.vector_store %arg7[%c0_6, %c0_7], %8 {strides = array<i32>} : memref<16x64xf32, #tpu.memory_space<vmem>>, vector<16x64xf32>,
    %c0_i32_8 = arith.constant 0 : i32
    %10 = arith.cmpi eq, %arg2, %c0_i32_8 : i32
    %11 = arith.extui %10 : i1 to i32
    %c0_i32_9 = arith.constant 0 : i32
    %12 = arith.cmpi ne, %11, %c0_i32_9 : i32
    scf.if %12 {
      %c0_10 = arith.constant 0 : index
      %c0_11 = arith.constant 0 : index
      %13 = vector.load %arg7[%c0_10, %c0_11] : memref<16x64xf32, #tpu.memory_space<vmem>>, vector<16x64xf32>
      %c0_12 = arith.constant 0 : index
      %c0_13 = arith.constant 0 : index
      %14 = vector.load %arg5[%c0_12, %c0_13] : memref<1x64xf32, #tpu.memory_space<vmem>>, vector<1x64xf32>
      %15 = vector.broadcast %14 : vector<1x64xf32> to vector<16x64xf32>
      %16 = arith.addf %13, %15 : vector<16x64xf32>
      %c0_14 = arith.constant 0 : index
      %c0_15 = arith.constant 0 : index
      %17 = vector.load %arg6[%c0_14, %c0_15] : memref<16x64xf32, #tpu.memory_space<vmem>>, vector<16x64xf32>
      tpu.vector_store %arg6[%c0_14, %c0_15], %16 {strides = array<i32>} : memref<16x64xf32, #tpu.memory_space<vmem>>, vector<16x64xf32>,
    } else {
    }
    return
  }
  func.func @transform_0(%arg0: i32, %arg1: i32, %arg2: i32) -> (i32, i32) {
    %c0_i32 = arith.constant 0 : i32
    return %arg0, %arg2 : i32, i32
  }
  func.func @transform_1(%arg0: i32, %arg1: i32, %arg2: i32) -> (i32, i32) {
    %c0_i32 = arith.constant 0 : i32
    return %arg2, %arg1 : i32, i32
  }
  func.func @transform_2(%arg0: i32, %arg1: i32, %arg2: i32) -> (i32, i32) {
    %c0_i32 = arith.constant 0 : i32
    %c0_i32_0 = arith.constant 0 : i32
    return %c0_i32, %arg1 : i32, i32
  }
  func.func @transform_3(%arg0: i32, %arg1: i32, %arg2: i32) -> (i32, i32) {
    %c0_i32 = arith.constant 0 : i32
    return %arg0, %arg1 : i32, i32
  }
}

module attributes {stable_mosaic.version = 11 : i64} {
  func.func @_matmul_kernel(%arg0: i32, %arg1: i32, %arg2: i32, %arg3: memref<16x32xf32, #tpu.memory_space<vmem>>, %arg4: memref<32x61xbf16, #tpu.memory_space<vmem>>, %arg5: memref<1x61xf32, #tpu.memory_space<vmem>>, %arg6: memref<16x61xf32, #tpu.memory_space<vmem>>, %arg7: memref<16x61xf32, #tpu.memory_space<vmem>>) attributes {dimension_semantics = [#tpu.dimension_semantics<parallel>, #tpu.dimension_semantics<parallel>, #tpu.dimension_semantics<arbitrary>], iteration_bounds = array<i64: 1, 1, 1>, scalar_prefetch = 0 : i64, scratch_operands = 1 : i64, tpu.core_type = #tpu.core_type<tc>, window_params = [{transform_indices = @transform_0, window_bounds = array<i64: 16, 32>}, {transform_indices = @transform_1, window_bounds = array<i64: 32, 61>}, {transform_indices = @transform_2, window_bounds = array<i64: 1, 61>}, {transform_indices = @transform_3, window_bounds = array<i64: 16, 61>}]} {
    %c0_i32 = arith.constant 0 : i32
    %0 = arith.cmpi eq, %arg2, %c0_i32 : i32
    %1 = arith.extui %0 : i1 to i32
    %c0_i32_0 = arith.constant 0 : i32
    %2 = arith.cmpi ne, %1, %c0_i32_0 : i32
    scf.if %2 {
      %cst_10 = arith.constant 0.000000e+00 : f32
      %13 = vector.broadcast %cst_10 : f32 to vector<16x61xf32>
      %c0_11 = arith.constant 0 : index
      %c0_12 = arith.constant 0 : index
      %14 = vector.load %arg7[%c0_11, %c0_12] : memref<16x61xf32, #tpu.memory_space<vmem>>, vector<16x61xf32>
      tpu.vector_store %arg7[%c0_11, %c0_12], %13 {strides = array<i32>} : memref<16x61xf32, #tpu.memory_space<vmem>>, vector<16x61xf32>,
    } else {
    }
    %c0 = arith.constant 0 : index
    %c0_1 = arith.constant 0 : index
    %3 = vector.load %arg7[%c0, %c0_1] : memref<16x61xf32, #tpu.memory_space<vmem>>, vector<16x61xf32>
    %c0_2 = arith.constant 0 : index
    %c0_3 = arith.constant 0 : index
    %4 = vector.load %arg3[%c0_2, %c0_3] : memref<16x32xf32, #tpu.memory_space<vmem>>, vector<16x32xf32>
    %5 = arith.truncf %4 : vector<16x32xf32> to vector<16x32xbf16>
    %c0_4 = arith.constant 0 : index
    %c0_5 = arith.constant 0 : index
    %6 = vector.load %arg4[%c0_4, %c0_5] : memref<32x61xbf16, #tpu.memory_space<vmem>>, vector<32x61xbf16>
    %cst = arith.constant dense<0.000000e+00> : vector<16x61xf32>
    %7 = tpu.matmul %5, %6, %cst {dimension_numbers = #tpu.dot_dimension_numbers<[1], [0], [0], [1], [0, 0, 1, 1], [], []>} : vector<16x32xbf16>, vector<32x61xbf16>, vector<16x61xf32> -> vector<16x61xf32>
    %8 = arith.addf %3, %7 : vector<16x61xf32>
    %c0_6 = arith.constant 0 : index
    %c0_7 = arith.constant 0 : index
    %9 = vector.load %arg7[%c0_6, %c0_7] : memref<16x61xf32, #tpu.memory_space<vmem>>, vector<16x61xf32>
    tpu.vector_store %arg7[%c0_6, %c0_7], %8 {strides = array<i32>} : memref<16x61xf32, #tpu.memory_space<vmem>>, vector<16x61xf32>,
    %c0_i32_8 = arith.constant 0 : i32
    %10 = arith.cmpi eq, %arg2, %c0_i32_8 : i32
    %11 = arith.extui %10 : i1 to i32
    %c0_i32_9 = arith.constant 0 : i32
    %12 = arith.cmpi ne, %11, %c0_i32_9 : i32
    scf.if %12 {
      %c0_10 = arith.constant 0 : index
      %c0_11 = arith.constant 0 : index
      %13 = vector.load %arg7[%c0_10, %c0_11] : memref<16x61xf32, #tpu.memory_space<vmem>>, vector<16x61xf32>
      %c0_12 = arith.constant 0 : index
      %c0_13 = arith.constant 0 : index
      %14 = vector.load %arg5[%c0_12, %c0_13] : memref<1x61xf32, #tpu.memory_space<vmem>>, vector<1x61xf32>
      %15 = vector.broadcast %14 : vector<1x61xf32> to vector<16x61xf32>
      %16 = arith.addf %13, %15 : vector<16x61xf32>
      %c0_14 = arith.constant 0 : index
      %c0_15 = arith.constant 0 : index
      %17 = vector.load %arg6[%c0_14, %c0_15] : memref<16x61xf32, #tpu.memory_space<vmem>>, vector<16x61xf32>
      tpu.vector_store %arg6[%c0_14, %c0_15], %16 {strides = array<i32>} : memref<16x61xf32, #tpu.memory_space<vmem>>, vector<16x61xf32>,
    } else {
    }
    return
  }
  func.func @transform_0(%arg0: i32, %arg1: i32, %arg2: i32) -> (i32, i32) {
    %c0_i32 = arith.constant 0 : i32
    return %arg0, %arg2 : i32, i32
  }
  func.func @transform_1(%arg0: i32, %arg1: i32, %arg2: i32) -> (i32, i32) {
    %c0_i32 = arith.constant 0 : i32
    return %arg2, %arg1 : i32, i32
  }
  func.func @transform_2(%arg0: i32, %arg1: i32, %arg2: i32) -> (i32, i32) {
    %c0_i32 = arith.constant 0 : i32
    %c0_i32_0 = arith.constant 0 : i32
    return %c0_i32, %arg1 : i32, i32
  }
  func.func @transform_3(%arg0: i32, %arg1: i32, %arg2: i32) -> (i32, i32) {
    %c0_i32 = arith.constant 0 : i32
    return %arg0, %arg1 : i32, i32
  }
}

</mosaic_0001>

<llo_original>
// kernel: transformer_forward.33
$region0: #{transformer_forward.33}
  #allocation0 [shape = 'u32[]', space=smem, size = 0x4, offset = 0x4, fixed_abs, tag = 'smem constant byte address 0x4 - core index']
  #allocation1 [shape = 'u32[144,128]{1,0:T(1,128)}', space=vmem, size = 0x12000, scoped, tag = 'internal scratch']
  #allocation2 [shape = 'f32[16,96]{1,0:T(8,128)}', space=vmem, size = 0x2000, scoped, tag = 'scratch operand']
  %s0 = inlined_call_operand.vmem [shape: f32[16,32], index: 0, kind: input, shape index: {}]
  %s1 = inlined_call_operand.vmem [shape: bf16[32,96], index: 1, kind: input, shape index: {}]
  %s2 = inlined_call_operand.vmem [shape: f32[1,96], index: 2, kind: input, shape index: {}]
  %s3 = inlined_call_operand.vmem [shape: f32[16,96], index: 3, kind: output, shape index: {}]
  %s4 = sld [smem:[#allocation0]]
  $region30: #{transformer_forward.33} parent=0
    _
  %s6 = ssub.s32 1, %s4
  %s7 = scalar_select 0, %s6, %s4
  // Predicated region
  $region2: #{transformer_forward.33} parent=0 // pred_check
    _
  $region3: #{transformer_forward.33} parent=0 // pred_check_branch
    %9 = sbr.rel (0) target = $region5
  $region4: #{transformer_forward.33} parent=0 // pred_region
    _
  $region5: #{transformer_forward.33} parent=0 // pred_fallthru
    _
  // Predicated region
  $region6: #{transformer_forward.33} parent=0 // pred_check
    _
  $region7: #{transformer_forward.33} parent=0 // pred_check_branch
    %11 = sbr.rel (0) target = $region9
  $region8: #{transformer_forward.33} parent=0 // pred_region
    _
  $region9: #{transformer_forward.33} parent=0 // pred_fallthru
    _
  // Predicated region
  $region10: #{transformer_forward.33} parent=0 // pred_check
    _
  $region11: #{transformer_forward.33} parent=0 // pred_check_branch
    %13 = sbr.rel (0) target = $region13
  $region12: #{transformer_forward.33} parent=0 // pred_region
    _
  $region13: #{transformer_forward.33} parent=0 // pred_fallthru
    _
  %p15 = scmp.eq.s32.totalorder 0, 0
  // Predicated region
  $region14: #{transformer_forward.33} parent=0 // pred_check
    %p16 = pneg %p15
  $region15: #{transformer_forward.33} parent=0 // pred_check_branch
    %18 = sbr.rel (%p16) target = $region17
  $region16: #{transformer_forward.33} parent=0 // pred_region
    %vm19 = vcmask 785408
    %20 = vst.msk [vmem:[#allocation2] sm:$0xff] %vm19, 0.0
    %21 = vst.msk [vmem:[#allocation2 + $0x8] sm:$0xff] %vm19, 0.0
  $region17: #{transformer_forward.33} parent=0 // pred_fallthru
    _
  %v22 = vld [vmem:[#allocation2] sm:$0xff]
  %v23 = vld [vmem:[#allocation2 + $0x8] sm:$0xff]
  %v24 = vld [vmem:[%s0] sm:$0xff]
  %v25 = vld [vmem:[%s0 + $0x8] sm:$0xff]
  %v26 = vpack.c.bf16 %v25, %v24
  %v27 = vld [vmem:[%s1] sm:$0xf]
  %v28 = vld [vmem:[%s1 + $0x4] sm:$0xf]
  %v29 = vld [vmem:[%s1 + $0x8] sm:$0xf]
  %v30 = vld [vmem:[%s1 + $0xc] sm:$0xf]
  %v35 = vunpack.c.l.b16 %v27
  %v36 = vunpack.c.l.b16 %v28
  %v37 = vunpack.c.l.b16 %v29
  %v38 = vunpack.c.l.b16 %v30
  %v39 = vpack.c.b16 %v36, %v35
  %v40 = vpack.c.b16 %v38, %v37
  %vm43 = vcmask 261120
  %v45 = vsel %vm43, %v26, 0
  %47 = vmatprep.subr.bf16.mxu0 0
  %48 = vmatpush1.bf16.msra.mxu0 %v39
  %49 = vmatprep.subr.bf16.mxu0 0
  %50 = vmatpush1.bf16.msra.mxu0 %v40
  %51 = vmatprep.subr.bf16.mxu0 0
  %52 = vmatpush1.bf16.msra.mxu0 0
  %53 = vmatprep.subr.bf16.mxu0 0
  %54 = vmatpush1.bf16.msra.mxu0 0
  %55 = vmatprep.subr.bf16.mxu0 0
  %56 = vmatpush1.bf16.msra.mxu0 0
  %57 = vmatprep.subr.bf16.mxu0 0
  %58 = vmatpush1.bf16.msra.mxu0 0
  %59 = vmatprep.subr.bf16.mxu0 0
  %60 = vmatpush1.bf16.msra.mxu0 0
  %61 = vmatprep.subr.bf16.mxu0 0
  %62 = vmatpush1.bf16.msra.mxu0 0
  %63 = vmatprep.subr.bf16.mxu0 0
  %64 = vmatpush1.bf16.msra.mxu0 0
  %65 = vmatprep.subr.bf16.mxu0 0
  %66 = vmatpush1.bf16.msra.mxu0 0
  %67 = vmatprep.subr.bf16.mxu0 0
  %68 = vmatpush1.bf16.msra.mxu0 0
  %69 = vmatprep.subr.bf16.mxu0 0
  %70 = vmatpush1.bf16.msra.mxu0 0
  %71 = vmatprep.subr.bf16.mxu0 0
  %72 = vmatpush1.bf16.msra.mxu0 0
  %73 = vmatprep.subr.bf16.mxu0 0
  %74 = vmatpush1.bf16.msra.mxu0 0
  %75 = vmatprep.subr.bf16.mxu0 0
  %76 = vmatpush1.bf16.msra.mxu0 0
  %77 = vmatprep.subr.bf16.mxu0 0
  %78 = vmatpush1.bf16.msra.mxu0 0
  %79 = vmatprep.mubr.bf16.mxu0 0
  %80 = vmatmul.mubr.bf16.gmra.mrb[0].mxu0 %v45
  %v81 = vpop.f32.mrb[0].mxu0
  %v82 = vadd.f32 0.0, %v81
  %v83 = vpop.f32.mrb[0].mxu0
  %v84 = vpop.f32.mrb[0].mxu0
  %v85 = vadd.f32 0.0, %v84
  %v86 = vpop.f32.mrb[0].mxu0
  %87 = vdwg.mxu0
  %v88 = vadd.f32 %v22, %v82
  %v89 = vadd.f32 %v23, %v85
  %vm90 = vcmask 785408
  %91 = vst.msk [vmem:[#allocation2] sm:$0xff] %vm90, %v88
  %92 = vst.msk [vmem:[#allocation2 + $0x8] sm:$0xff] %vm90, %v89
  // Predicated region
  $region18: #{transformer_forward.33} parent=0 // pred_check
    %p93 = pneg %p15
  $region19: #{transformer_forward.33} parent=0 // pred_check_branch
    %95 = sbr.rel (%p93) target = $region21
  $region20: #{transformer_forward.33} parent=0 // pred_region
    %v96 = vld [vmem:[#allocation2] sm:$0xff]
    %v97 = vld [vmem:[#allocation2 + $0x8] sm:$0xff]
    %v98 = vld [vmem:[%s2] sm:$0x1]
    %v100 = vlaneseq
    %v101 = vshrl.u32 %v100, 7
    %v102 = vsub.s32 0, %v101
    %v103 = vrot.slane %v98, %v102
    %v105 = vadd.f32 %v96, %v103
    %v106 = vadd.f32 %v97, %v103
    %107 = vst.msk [vmem:[%s3] sm:$0xff] %vm90, %v105
    %108 = vst.msk [vmem:[%s3 + $0x8] sm:$0xff] %vm90, %v106
  $region21: #{transformer_forward.33} parent=0 // pred_fallthru
    _
  // Predicated region
  $region22: #{transformer_forward.33} parent=0 // pred_check
    _
  $region23: #{transformer_forward.33} parent=0 // pred_check_branch
    %110 = sbr.rel (0) target = $region25
  $region24: #{transformer_forward.33} parent=0 // pred_region
    _
  $region25: #{transformer_forward.33} parent=0 // pred_fallthru
    _
  // Predicated region
  $region26: #{transformer_forward.33} parent=0 // pred_check
    _
  $region27: #{transformer_forward.33} parent=0 // pred_check_branch
    %112 = sbr.rel (0) target = $region29
  $region28: #{transformer_forward.33} parent=0 // pred_region
    _
  $region29: #{transformer_forward.33} parent=0 // pred_fallthru
    _

// kernel: transformer_forward.35
$region0: #{transformer_forward.35}
  #allocation0 [shape = 'u32[]', space=smem, size = 0x4, offset = 0x4, fixed_abs, tag = 'smem constant byte address 0x4 - core index']
  #allocation1 [shape = 'u32[144,128]{1,0:T(1,128)}', space=vmem, size = 0x12000, scoped, tag = 'internal scratch']
  #allocation2 [shape = 'f32[16,32]{1,0:T(8,128)}', space=vmem, size = 0x2000, scoped, tag = 'scratch operand']
  %s0 = inlined_call_operand.vmem [shape: f32[16,32], index: 0, kind: input, shape index: {}]
  %s1 = inlined_call_operand.vmem [shape: bf16[32,32], index: 1, kind: input, shape index: {}]
  %s2 = inlined_call_operand.vmem [shape: f32[1,32], index: 2, kind: input, shape index: {}]
  %s3 = inlined_call_operand.vmem [shape: f32[16,32], index: 3, kind: input, shape index: {}]
  %s4 = inlined_call_operand.vmem [shape: f32[1,32], index: 4, kind: input, shape index: {}]
  %s5 = inlined_call_operand.vmem [shape: f32[1,32], index: 5, kind: input, shape index: {}]
  %s6 = inlined_call_operand.vmem [shape: f32[16,32], index: 6, kind: output, shape index: {}]
  %s7 = sld [smem:[#allocation0]]
  $region42: #{transformer_forward.35} parent=0
    _
  %s9 = ssub.s32 1, %s7
  %s10 = scalar_select 0, %s9, %s7
  // Predicated region
  $region2: #{transformer_forward.35} parent=0 // pred_check
    _
  $region3: #{transformer_forward.35} parent=0 // pred_check_branch
    %12 = sbr.rel (0) target = $region5
  $region4: #{transformer_forward.35} parent=0 // pred_region
    _
  $region5: #{transformer_forward.35} parent=0 // pred_fallthru
    _
  // Predicated region
  $region6: #{transformer_forward.35} parent=0 // pred_check
    _
  $region7: #{transformer_forward.35} parent=0 // pred_check_branch
    %14 = sbr.rel (0) target = $region9
  $region8: #{transformer_forward.35} parent=0 // pred_region
    _
  $region9: #{transformer_forward.35} parent=0 // pred_fallthru
    _
  // Predicated region
  $region10: #{transformer_forward.35} parent=0 // pred_check
    _
  $region11: #{transformer_forward.35} parent=0 // pred_check_branch
    %16 = sbr.rel (0) target = $region13
  $region12: #{transformer_forward.35} parent=0 // pred_region
    _
  $region13: #{transformer_forward.35} parent=0 // pred_fallthru
    _
  // Predicated region
  $region14: #{transformer_forward.35} parent=0 // pred_check
    _
  $region15: #{transformer_forward.35} parent=0 // pred_check_branch
    %18 = sbr.rel (0) target = $region17
  $region16: #{transformer_forward.35} parent=0 // pred_region
    _
  $region17: #{transformer_forward.35} parent=0 // pred_fallthru
    _
  // Predicated region
  $region18: #{transformer_forward.35} parent=0 // pred_check
    _
  $region19: #{transformer_forward.35} parent=0 // pred_check_branch
    %20 = sbr.rel (0) target = $region21
  $region20: #{transformer_forward.35} parent=0 // pred_region
    _
  $region21: #{transformer_forward.35} parent=0 // pred_fallthru
    _
  // Predicated region
  $region22: #{transformer_forward.35} parent=0 // pred_check
    _
  $region23: #{transformer_forward.35} parent=0 // pred_check_branch
    %22 = sbr.rel (0) target = $region25
  $region24: #{transformer_forward.35} parent=0 // pred_region
    _
  $region25: #{transformer_forward.35} parent=0 // pred_fallthru
    _
  %p24 = scmp.eq.s32.totalorder 0, 0
  // Predicated region
  $region26: #{transformer_forward.35} parent=0 // pred_check
    %p25 = pneg %p24
  $region27: #{transformer_forward.35} parent=0 // pred_check_branch
    %27 = sbr.rel (%p25) target = $region29
  $region28: #{transformer_forward.35} parent=0 // pred_region
    %vm28 = vcmask 261120
    %29 = vst.msk [vmem:[#allocation2] sm:$0xff] %vm28, 0.0
    %30 = vst.msk [vmem:[#allocation2 + $0x8] sm:$0xff] %vm28, 0.0
  $region29: #{transformer_forward.35} parent=0 // pred_fallthru
    _
  %v31 = vld [vmem:[#allocation2] sm:$0xff]
  %v32 = vld [vmem:[#allocation2 + $0x8] sm:$0xff]
  %v33 = vld [vmem:[%s0] sm:$0xff]
  %v34 = vld [vmem:[%s0 + $0x8] sm:$0xff]
  %v35 = vpack.c.bf16 %v34, %v33
  %v36 = vld [vmem:[%s1] sm:$0xf]
  %v37 = vld [vmem:[%s1 + $0x4] sm:$0xf]
  %v38 = vld [vmem:[%s1 + $0x8] sm:$0xf]
  %v39 = vld [vmem:[%s1 + $0xc] sm:$0xf]
  %v44 = vunpack.c.l.b16 %v36
  %v45 = vunpack.c.l.b16 %v37
  %v46 = vunpack.c.l.b16 %v38
  %v47 = vunpack.c.l.b16 %v39
  %v48 = vpack.c.b16 %v45, %v44
  %v49 = vpack.c.b16 %v47, %v46
  %vm52 = vcmask 261120
  %v54 = vsel %vm52, %v35, 0
  %56 = vmatprep.subr.bf16.mxu0 0
  %57 = vmatpush1.bf16.msra.mxu0 %v48
  %58 = vmatprep.subr.bf16.mxu0 0
  %59 = vmatpush1.bf16.msra.mxu0 %v49
  %60 = vmatprep.subr.bf16.mxu0 0
  %61 = vmatpush1.bf16.msra.mxu0 0
  %62 = vmatprep.subr.bf16.mxu0 0
  %63 = vmatpush1.bf16.msra.mxu0 0
  %64 = vmatprep.subr.bf16.mxu0 0
  %65 = vmatpush1.bf16.msra.mxu0 0
  %66 = vmatprep.subr.bf16.mxu0 0
  %67 = vmatpush1.bf16.msra.mxu0 0
  %68 = vmatprep.subr.bf16.mxu0 0
  %69 = vmatpush1.bf16.msra.mxu0 0
  %70 = vmatprep.subr.bf16.mxu0 0
  %71 = vmatpush1.bf16.msra.mxu0 0
  %72 = vmatprep.subr.bf16.mxu0 0
  %73 = vmatpush1.bf16.msra.mxu0 0
  %74 = vmatprep.subr.bf16.mxu0 0
  %75 = vmatpush1.bf16.msra.mxu0 0
  %76 = vmatprep.subr.bf16.mxu0 0
  %77 = vmatpush1.bf16.msra.mxu0 0
  %78 = vmatprep.subr.bf16.mxu0 0
  %79 = vmatpush1.bf16.msra.mxu0 0
  %80 = vmatprep.subr.bf16.mxu0 0
  %81 = vmatpush1.bf16.msra.mxu0 0
  %82 = vmatprep.subr.bf16.mxu0 0
  %83 = vmatpush1.bf16.msra.mxu0 0
  %84 = vmatprep.subr.bf16.mxu0 0
  %85 = vmatpush1.bf16.msra.mxu0 0
  %86 = vmatprep.subr.bf16.mxu0 0
  %87 = vmatpush1.bf16.msra.mxu0 0
  %88 = vmatprep.mubr.bf16.mxu0 0
  %89 = vmatmul.mubr.bf16.gmra.mrb[0].mxu0 %v54
  %v90 = vpop.f32.mrb[0].mxu0
  %v91 = vadd.f32 0.0, %v90
  %v92 = vpop.f32.mrb[0].mxu0
  %v93 = vpop.f32.mrb[0].mxu0
  %v94 = vadd.f32 0.0, %v93
  %v95 = vpop.f32.mrb[0].mxu0
  %96 = vdwg.mxu0
  %v97 = vadd.f32 %v31, %v91
  %v98 = vadd.f32 %v32, %v94
  %99 = vst.msk [vmem:[#allocation2] sm:$0xff] %vm52, %v97
  %100 = vst.msk [vmem:[#allocation2 + $0x8] sm:$0xff] %vm52, %v98
  // Predicated region
  $region30: #{transformer_forward.35} parent=0 // pred_check
    %p101 = pneg %p24
  $region31: #{transformer_forward.35} parent=0 // pred_check_branch
    %103 = sbr.rel (%p101) target = $region33
  $region32: #{transformer_forward.35} parent=0 // pred_region
    %v104 = vld [vmem:[#allocation2] sm:$0xff]
    %v105 = vld [vmem:[#allocation2 + $0x8] sm:$0xff]
    %v106 = vld [vmem:[%s2] sm:$0x1]
    %v108 = vlaneseq
    %v109 = vshrl.u32 %v108, 7
    %v110 = vsub.s32 0, %v109
    %v111 = vrot.slane %v106, %v110
    %v113 = vadd.f32 %v104, %v111
    %v114 = vadd.f32 %v105, %v111
    %v115 = vld [vmem:[%s3] sm:$0xff]
    %v116 = vld [vmem:[%s3 + $0x8] sm:$0xff]
    %v117 = vadd.f32 %v113, %v115
    %v118 = vadd.f32 %v114, %v116
    %v119 = vsel %vm52, %v117, 0.0
    %120 = vadd.xlane.f32.xlu0 %v119
    %v121 = vpop.xlane.xlu0 %120
    %v122 = vsel %vm52, %v118, 0.0
    %123 = vadd.xlane.f32.xlu0 %v122
    %v124 = vpop.xlane.xlu0 %123
    %v125 = vrcp.pop 32.0
    %v126 = vmul.f32 %v121, %v125
    %v127 = vmul.f32 %v124, %v125
    %v128 = vsub.f32 %v117, %v126
    %v129 = vsub.f32 %v118, %v127
    %v130 = vmul.f32 %v128, %v128
    %v131 = vmul.f32 %v129, %v129
    %v132 = vsel %vm52, %v130, 0.0
    %133 = vadd.xlane.f32.xlu0 %v132
    %v134 = vpop.xlane.xlu0 %133
    %v135 = vsel %vm52, %v131, 0.0
    %136 = vadd.xlane.f32.xlu0 %v135
    %v137 = vpop.xlane.xlu0 %136
    %v138 = vmul.f32 %v134, %v125
    %v139 = vmul.f32 %v137, %v125
    %v140 = vadd.f32 %v138, 1e-12
    %v141 = vadd.f32 %v139, 1e-12
    %v142 = vrsqrt.pop %v140
    %v143 = vrsqrt.pop %v141
    %v144 = vmul.f32 %v128, %v142
    %v145 = vmul.f32 %v129, %v143
    %v146 = vld [vmem:[%s4] sm:$0x1]
    %v148 = vlaneseq
    %v149 = vshrl.u32 %v148, 7
    %v150 = vsub.s32 0, %v149
    %v151 = vrot.slane %v146, %v150
    %v153 = vmul.f32 %v144, %v151
    %v154 = vmul.f32 %v145, %v151
    %v155 = vld [vmem:[%s5] sm:$0x1]
    %v157 = vlaneseq
    %v158 = vshrl.u32 %v157, 7
    %v159 = vsub.s32 0, %v158
    %v160 = vrot.slane %v155, %v159
    %v162 = vadd.f32 %v153, %v160
    %v163 = vadd.f32 %v154, %v160
    %164 = vst.msk [vmem:[%s6] sm:$0xff] %vm52, %v162
    %165 = vst.msk [vmem:[%s6 + $0x8] sm:$0xff] %vm52, %v163
  $region33: #{transformer_forward.35} parent=0 // pred_fallthru
    _
  // Predicated region
  $region34: #{transformer_forward.35} parent=0 // pred_check
    _
  $region35: #{transformer_forward.35} parent=0 // pred_check_branch
    %167 = sbr.rel (0) target = $region37
  $region36: #{transformer_forward.35} parent=0 // pred_region
    _
  $region37: #{transformer_forward.35} parent=0 // pred_fallthru
    _
  // Predicated region
  $region38: #{transformer_forward.35} parent=0 // pred_check
    _
  $region39: #{transformer_forward.35} parent=0 // pred_check_branch
    %169 = sbr.rel (0) target = $region41
  $region40: #{transformer_forward.35} parent=0 // pred_region
    _
  $region41: #{transformer_forward.35} parent=0 // pred_fallthru
    _

// kernel: transformer_forward.36
$region0: #{transformer_forward.36}
  #allocation0 [shape = 'u32[]', space=smem, size = 0x4, offset = 0x4, fixed_abs, tag = 'smem constant byte address 0x4 - core index']
  #allocation1 [shape = 'u32[144,128]{1,0:T(1,128)}', space=vmem, size = 0x12000, scoped, tag = 'internal scratch']
  #allocation2 [shape = 'f32[16,32]{1,0:T(8,128)}', space=vmem, size = 0x2000, scoped, tag = 'scratch operand']
  %s0 = inlined_call_operand.vmem [shape: f32[16,32], index: 0, kind: input, shape index: {}]
  %s1 = inlined_call_operand.vmem [shape: bf16[32,32], index: 1, kind: input, shape index: {}]
  %s2 = inlined_call_operand.vmem [shape: f32[1,32], index: 2, kind: input, shape index: {}]
  %s3 = inlined_call_operand.vmem [shape: f32[16,32], index: 3, kind: output, shape index: {}]
  %s4 = sld [smem:[#allocation0]]
  $region30: #{transformer_forward.36} parent=0
    _
  %s6 = ssub.s32 1, %s4
  %s7 = scalar_select 0, %s6, %s4
  // Predicated region
  $region2: #{transformer_forward.36} parent=0 // pred_check
    _
  $region3: #{transformer_forward.36} parent=0 // pred_check_branch
    %9 = sbr.rel (0) target = $region5
  $region4: #{transformer_forward.36} parent=0 // pred_region
    _
  $region5: #{transformer_forward.36} parent=0 // pred_fallthru
    _
  // Predicated region
  $region6: #{transformer_forward.36} parent=0 // pred_check
    _
  $region7: #{transformer_forward.36} parent=0 // pred_check_branch
    %11 = sbr.rel (0) target = $region9
  $region8: #{transformer_forward.36} parent=0 // pred_region
    _
  $region9: #{transformer_forward.36} parent=0 // pred_fallthru
    _
  // Predicated region
  $region10: #{transformer_forward.36} parent=0 // pred_check
    _
  $region11: #{transformer_forward.36} parent=0 // pred_check_branch
    %13 = sbr.rel (0) target = $region13
  $region12: #{transformer_forward.36} parent=0 // pred_region
    _
  $region13: #{transformer_forward.36} parent=0 // pred_fallthru
    _
  %p15 = scmp.eq.s32.totalorder 0, 0
  // Predicated region
  $region14: #{transformer_forward.36} parent=0 // pred_check
    %p16 = pneg %p15
  $region15: #{transformer_forward.36} parent=0 // pred_check_branch
    %18 = sbr.rel (%p16) target = $region17
  $region16: #{transformer_forward.36} parent=0 // pred_region
    %vm19 = vcmask 261120
    %20 = vst.msk [vmem:[#allocation2] sm:$0xff] %vm19, 0.0
    %21 = vst.msk [vmem:[#allocation2 + $0x8] sm:$0xff] %vm19, 0.0
  $region17: #{transformer_forward.36} parent=0 // pred_fallthru
    _
  %v22 = vld [vmem:[#allocation2] sm:$0xff]
  %v23 = vld [vmem:[#allocation2 + $0x8] sm:$0xff]
  %v24 = vld [vmem:[%s0] sm:$0xff]
  %v25 = vld [vmem:[%s0 + $0x8] sm:$0xff]
  %v26 = vpack.c.bf16 %v25, %v24
  %v27 = vld [vmem:[%s1] sm:$0xf]
  %v28 = vld [vmem:[%s1 + $0x4] sm:$0xf]
  %v29 = vld [vmem:[%s1 + $0x8] sm:$0xf]
  %v30 = vld [vmem:[%s1 + $0xc] sm:$0xf]
  %v35 = vunpack.c.l.b16 %v27
  %v36 = vunpack.c.l.b16 %v28
  %v37 = vunpack.c.l.b16 %v29
  %v38 = vunpack.c.l.b16 %v30
  %v39 = vpack.c.b16 %v36, %v35
  %v40 = vpack.c.b16 %v38, %v37
  %vm43 = vcmask 261120
  %v45 = vsel %vm43, %v26, 0
  %47 = vmatprep.subr.bf16.mxu0 0
  %48 = vmatpush1.bf16.msra.mxu0 %v39
  %49 = vmatprep.subr.bf16.mxu0 0
  %50 = vmatpush1.bf16.msra.mxu0 %v40
  %51 = vmatprep.subr.bf16.mxu0 0
  %52 = vmatpush1.bf16.msra.mxu0 0
  %53 = vmatprep.subr.bf16.mxu0 0
  %54 = vmatpush1.bf16.msra.mxu0 0
  %55 = vmatprep.subr.bf16.mxu0 0
  %56 = vmatpush1.bf16.msra.mxu0 0
  %57 = vmatprep.subr.bf16.mxu0 0
  %58 = vmatpush1.bf16.msra.mxu0 0
  %59 = vmatprep.subr.bf16.mxu0 0
  %60 = vmatpush1.bf16.msra.mxu0 0
  %61 = vmatprep.subr.bf16.mxu0 0
  %62 = vmatpush1.bf16.msra.mxu0 0
  %63 = vmatprep.subr.bf16.mxu0 0
  %64 = vmatpush1.bf16.msra.mxu0 0
  %65 = vmatprep.subr.bf16.mxu0 0
  %66 = vmatpush1.bf16.msra.mxu0 0
  %67 = vmatprep.subr.bf16.mxu0 0
  %68 = vmatpush1.bf16.msra.mxu0 0
  %69 = vmatprep.subr.bf16.mxu0 0
  %70 = vmatpush1.bf16.msra.mxu0 0
  %71 = vmatprep.subr.bf16.mxu0 0
  %72 = vmatpush1.bf16.msra.mxu0 0
  %73 = vmatprep.subr.bf16.mxu0 0
  %74 = vmatpush1.bf16.msra.mxu0 0
  %75 = vmatprep.subr.bf16.mxu0 0
  %76 = vmatpush1.bf16.msra.mxu0 0
  %77 = vmatprep.subr.bf16.mxu0 0
  %78 = vmatpush1.bf16.msra.mxu0 0
  %79 = vmatprep.mubr.bf16.mxu0 0
  %80 = vmatmul.mubr.bf16.gmra.mrb[0].mxu0 %v45
  %v81 = vpop.f32.mrb[0].mxu0
  %v82 = vadd.f32 0.0, %v81
  %v83 = vpop.f32.mrb[0].mxu0
  %v84 = vpop.f32.mrb[0].mxu0
  %v85 = vadd.f32 0.0, %v84
  %v86 = vpop.f32.mrb[0].mxu0
  %87 = vdwg.mxu0
  %v88 = vadd.f32 %v22, %v82
  %v89 = vadd.f32 %v23, %v85
  %90 = vst.msk [vmem:[#allocation2] sm:$0xff] %vm43, %v88
  %91 = vst.msk [vmem:[#allocation2 + $0x8] sm:$0xff] %vm43, %v89
  // Predicated region
  $region18: #{transformer_forward.36} parent=0 // pred_check
    %p92 = pneg %p15
  $region19: #{transformer_forward.36} parent=0 // pred_check_branch
    %94 = sbr.rel (%p92) target = $region21
  $region20: #{transformer_forward.36} parent=0 // pred_region
    %v95 = vld [vmem:[#allocation2] sm:$0xff]
    %v96 = vld [vmem:[#allocation2 + $0x8] sm:$0xff]
    %v97 = vld [vmem:[%s2] sm:$0x1]
    %v99 = vlaneseq
    %v100 = vshrl.u32 %v99, 7
    %v101 = vsub.s32 0, %v100
    %v102 = vrot.slane %v97, %v101
    %v104 = vadd.f32 %v95, %v102
    %v105 = vadd.f32 %v96, %v102
    %106 = vst.msk [vmem:[%s3] sm:$0xff] %vm43, %v104
    %107 = vst.msk [vmem:[%s3 + $0x8] sm:$0xff] %vm43, %v105
  $region21: #{transformer_forward.36} parent=0 // pred_fallthru
    _
  // Predicated region
  $region22: #{transformer_forward.36} parent=0 // pred_check
    _
  $region23: #{transformer_forward.36} parent=0 // pred_check_branch
    %109 = sbr.rel (0) target = $region25
  $region24: #{transformer_forward.36} parent=0 // pred_region
    _
  $region25: #{transformer_forward.36} parent=0 // pred_fallthru
    _
  // Predicated region
  $region26: #{transformer_forward.36} parent=0 // pred_check
    _
  $region27: #{transformer_forward.36} parent=0 // pred_check_branch
    %111 = sbr.rel (0) target = $region29
  $region28: #{transformer_forward.36} parent=0 // pred_region
    _
  $region29: #{transformer_forward.36} parent=0 // pred_fallthru
    _

// kernel: transformer_forward.34
$region0: #{transformer_forward.34}
  #allocation0 [shape = 'u32[]', space=smem, size = 0x4, offset = 0x4, fixed_abs, tag = 'smem constant byte address 0x4 - core index']
  #allocation1 [shape = 'u32[144,128]{1,0:T(1,128)}', space=vmem, size = 0x12000, scoped, tag = 'internal scratch']
  %s0 = inlined_call_operand.vmem [shape: f32[2,4,8,8], index: 0, kind: input, shape index: {}]
  %s1 = inlined_call_operand.vmem [shape: f32[2,4,8,8], index: 1, kind: input, shape index: {}]
  %s2 = inlined_call_operand.vmem [shape: f32[2,4,8,8], index: 2, kind: input, shape index: {}]
  %s3 = inlined_call_operand.vmem [shape: f32[2,8,8], index: 3, kind: input, shape index: {}]
  %s4 = inlined_call_operand.vmem [shape: f32[2,4,8,8], index: 4, kind: output, shape index: {}]
  %s5 = sld [smem:[#allocation0]]
  $region49: #{transformer_forward.34} parent=0
    _
  %s7 = ssub.s32 1, %s5
  %s8 = scalar_select 0, %s7, %s5
  loop: start=0, step=1, limit=4
  $region2: #{transformer_forward.34} parent=0 // loop_pre_header
    _
  $region3: #{transformer_forward.34} parent=0 // loop_header
    %s10 = sphi 0, %s14
    %p11 = scmp.ge.s32.totalorder %s10, 4
    %s20 = sphi 0, %s22
    %s23 = sphi 0, %s20
    %s24 = sphi 0, %s23
    %s40 = sphi 0, %s24
    %s46 = sphi 0, %s48
    %s49 = sphi 0, %s46
    %s50 = sphi 0, %s49
    %s66 = sphi 0, %s50
    %s72 = sphi 0, %s74
    %s75 = sphi 0, %s72
    %s76 = sphi 0, %s75
    %s92 = sphi 0, %s76
    %s98 = sphi 0, %s100
    %s101 = sphi 0, %s98
    %s102 = sphi 0, %s101
    %s118 = sphi 0, %s102
    %s124 = sphi 0, %s126
    %s127 = sphi 0, %s124
    %s128 = sphi 0, %s127
    %s144 = sphi 0, %s128
  $region4: #{transformer_forward.34} parent=0 // loop_header_branch
    %13 = sbr.rel (%p11) target = $region8
  $region5: #{transformer_forward.34} parent=0 // loop_body
    %s15 = ssub.s32 %s10, 1
    %s16 = ssub.s32 %s10, 2
    %s17 = sadd.s32 %s10, 1
    %s18 = ssub.s32 %s10, %s17
    %p19 = scmp.eq.s32.totalorder %s18, 0
    %s21 = sadd.s32 %s20, 1
    %s22 = scalar_select %p19, %s20, %s21
    %p25 = pneg %p19
    %p26 = scmp.eq.s32.totalorder %s10, 1
    %p27 = por %p25, %p26
    %p28 = scmp.ne.s32.totalorder %s20, %s23
    %p29 = scmp.eq.s32.totalorder %s10, 0
    %p30 = por %p28, %p29
    %p31 = scmp.ne.s32.totalorder %s20, %s23
    %p32 = scmp.eq.s32.totalorder %s15, 1
    %p33 = por %p31, %p32
    %p34 = scmp.ne.s32.totalorder %s23, %s24
    %p35 = scmp.eq.s32.totalorder %s15, 0
    %p36 = por %p34, %p35
    %p37 = scmp.ne.s32.totalorder %s23, %s24
    %p38 = scmp.eq.s32.totalorder %s16, 1
    %p39 = por %p37, %p38
    %p41 = scmp.ne.s32.totalorder %s24, %s40
    %p42 = scmp.eq.s32.totalorder %s16, 0
    %p43 = por %p41, %p42
    %s44 = ssub.s32 %s10, %s17
    %p45 = scmp.eq.s32.totalorder %s44, 0
    %s47 = sadd.s32 %s46, 1
    %s48 = scalar_select %p45, %s46, %s47
    %p51 = pneg %p45
    %p52 = scmp.eq.s32.totalorder %s10, 1
    %p53 = por %p51, %p52
    %p54 = scmp.ne.s32.totalorder %s46, %s49
    %p55 = scmp.eq.s32.totalorder %s10, 0
    %p56 = por %p54, %p55
    %p57 = scmp.ne.s32.totalorder %s46, %s49
    %p58 = scmp.eq.s32.totalorder %s15, 1
    %p59 = por %p57, %p58
    %p60 = scmp.ne.s32.totalorder %s49, %s50
    %p61 = scmp.eq.s32.totalorder %s15, 0
    %p62 = por %p60, %p61
    %p63 = scmp.ne.s32.totalorder %s49, %s50
    %p64 = scmp.eq.s32.totalorder %s16, 1
    %p65 = por %p63, %p64
    %p67 = scmp.ne.s32.totalorder %s50, %s66
    %p68 = scmp.eq.s32.totalorder %s16, 0
    %p69 = por %p67, %p68
    %s70 = ssub.s32 %s10, %s17
    %p71 = scmp.eq.s32.totalorder %s70, 0
    %s73 = sadd.s32 %s72, 1
    %s74 = scalar_select %p71, %s72, %s73
    %p77 = pneg %p71
    %p78 = scmp.eq.s32.totalorder %s10, 1
    %p79 = por %p77, %p78
    %p80 = scmp.ne.s32.totalorder %s72, %s75
    %p81 = scmp.eq.s32.totalorder %s10, 0
    %p82 = por %p80, %p81
    %p83 = scmp.ne.s32.totalorder %s72, %s75
    %p84 = scmp.eq.s32.totalorder %s15, 1
    %p85 = por %p83, %p84
    %p86 = scmp.ne.s32.totalorder %s75, %s76
    %p87 = scmp.eq.s32.totalorder %s15, 0
    %p88 = por %p86, %p87
    %p89 = scmp.ne.s32.totalorder %s75, %s76
    %p90 = scmp.eq.s32.totalorder %s16, 1
    %p91 = por %p89, %p90
    %p93 = scmp.ne.s32.totalorder %s76, %s92
    %p94 = scmp.eq.s32.totalorder %s16, 0
    %p95 = por %p93, %p94
    %s96 = ssub.s32 %s10, %s17
    %p97 = scmp.eq.s32.totalorder %s96, 0
    %s99 = sadd.s32 %s98, 1
    %s100 = scalar_select %p97, %s98, %s99
    %p103 = pneg %p97
    %p104 = scmp.eq.s32.totalorder %s10, 1
    %p105 = por %p103, %p104
    %p106 = scmp.ne.s32.totalorder %s98, %s101
    %p107 = scmp.eq.s32.totalorder %s10, 0
    %p108 = por %p106, %p107
    %p109 = scmp.ne.s32.totalorder %s98, %s101
    %p110 = scmp.eq.s32.totalorder %s15, 1
    %p111 = por %p109, %p110
    %p112 = scmp.ne.s32.totalorder %s101, %s102
    %p113 = scmp.eq.s32.totalorder %s15, 0
    %p114 = por %p112, %p113
    %p115 = scmp.ne.s32.totalorder %s101, %s102
    %p116 = scmp.eq.s32.totalorder %s16, 1
    %p117 = por %p115, %p116
    %p119 = scmp.ne.s32.totalorder %s102, %s118
    %p120 = scmp.eq.s32.totalorder %s16, 0
    %p121 = por %p119, %p120
    %s122 = ssub.s32 %s10, %s17
    %p123 = scmp.eq.s32.totalorder %s122, 0
    %s125 = sadd.s32 %s124, 1
    %s126 = scalar_select %p123, %s124, %s125
    %p129 = pneg %p123
    %p130 = scmp.eq.s32.totalorder %s10, 1
    %p131 = por %p129, %p130
    %p132 = scmp.ne.s32.totalorder %s124, %s127
    %p133 = scmp.eq.s32.totalorder %s10, 0
    %p134 = por %p132, %p133
    %p135 = scmp.ne.s32.totalorder %s124, %s127
    %p136 = scmp.eq.s32.totalorder %s15, 1
    %p137 = por %p135, %p136
    %p138 = scmp.ne.s32.totalorder %s127, %s128
    %p139 = scmp.eq.s32.totalorder %s15, 0
    %p140 = por %p138, %p139
    %p141 = scmp.ne.s32.totalorder %s127, %s128
    %p142 = scmp.eq.s32.totalorder %s16, 1
    %p143 = por %p141, %p142
    %p145 = scmp.ne.s32.totalorder %s128, %s144
    %p146 = scmp.eq.s32.totalorder %s16, 0
    %p147 = por %p145, %p146
    %p148 = scmp.le.s32.totalorder 1, %s10
    %p149 = scmp.lt.s32.totalorder %s10, 3
    %p150 = pnand %p148, %p149
    %p151 = pneg %p150
    // Predicated region
    $region9: #{transformer_forward.34} parent=5 // pred_check
      _
    $region10: #{transformer_forward.34} parent=5 // pred_check_branch
      %153 = sbr.rel (%p150) target = $region12
    $region11: #{transformer_forward.34} parent=5 // pred_region
      %s154 = ssub.s32 %s10, 1
    $region12: #{transformer_forward.34} parent=5 // pred_fallthru
      _
    %p155 = scmp.lt.s32.totalorder %s10, 2
    // Predicated region
    $region13: #{transformer_forward.34} parent=5 // pred_check
      %p156 = pneg %p155
    $region14: #{transformer_forward.34} parent=5 // pred_check_branch
      %158 = sbr.rel (%p156) target = $region16
    $region15: #{transformer_forward.34} parent=5 // pred_region
      // Predicated region
      $region17: #{transformer_forward.34} parent=15 // pred_check
        %p159 = pneg %p30
      $region18: #{transformer_forward.34} parent=15 // pred_check_branch
        %161 = sbr.rel (%p159) target = $region20
      $region19: #{transformer_forward.34} parent=15 // pred_region
        %p162 = scmp.lt.s32.totalorder %s10, 1
        %s163 = scalar_select %p162, %s10, 1
        %s164 = smul.addr %s163, 4
        %s165 = smul.addr %s164, 8
        %s166 = scalar_lea.vmem %s0, %s165
      $region20: #{transformer_forward.34} parent=15 // pred_fallthru
        _
      // Predicated region
      $region21: #{transformer_forward.34} parent=15 // pred_check
        %p167 = pneg %p56
      $region22: #{transformer_forward.34} parent=15 // pred_check_branch
        %169 = sbr.rel (%p167) target = $region24
      $region23: #{transformer_forward.34} parent=15 // pred_region
        %p170 = scmp.lt.s32.totalorder %s10, 1
        %s171 = scalar_select %p170, %s10, 1
        %s172 = smul.addr %s171, 4
        %s173 = smul.addr %s172, 8
        %s174 = scalar_lea.vmem %s1, %s173
      $region24: #{transformer_forward.34} parent=15 // pred_fallthru
        _
      // Predicated region
      $region25: #{transformer_forward.34} parent=15 // pred_check
        %p175 = pneg %p82
      $region26: #{transformer_forward.34} parent=15 // pred_check_branch
        %177 = sbr.rel (%p175) target = $region28
      $region27: #{transformer_forward.34} parent=15 // pred_region
        %p178 = scmp.lt.s32.totalorder %s10, 1
        %s179 = scalar_select %p178, %s10, 1
        %s180 = smul.addr %s179, 4
        %s181 = smul.addr %s180, 8
        %s182 = scalar_lea.vmem %s2, %s181
      $region28: #{transformer_forward.34} parent=15 // pred_fallthru
        _
      // Predicated region
      $region29: #{transformer_forward.34} parent=15 // pred_check
        %p183 = pneg %p108
      $region30: #{transformer_forward.34} parent=15 // pred_check_branch
        %185 = sbr.rel (%p183) target = $region32
      $region31: #{transformer_forward.34} parent=15 // pred_region
        %p186 = scmp.lt.s32.totalorder %s10, 1
        %s187 = scalar_select %p186, %s10, 1
        %s188 = smul.addr %s187, 8
        %s189 = scalar_lea.vmem %s3, %s188
      $region32: #{transformer_forward.34} parent=15 // pred_fallthru
        _
    $region16: #{transformer_forward.34} parent=5 // pred_fallthru
      _
    %p190 = scmp.le.s32.totalorder 1, %s10
    %p191 = scmp.lt.s32.totalorder %s10, 3
    %p192 = pnand %p190, %p191
    %p193 = pneg %p192
    // Predicated region
    $region33: #{transformer_forward.34} parent=5 // pred_check
      _
    $region34: #{transformer_forward.34} parent=5 // pred_check_branch
      %195 = sbr.rel (%p192) target = $region36
    $region35: #{transformer_forward.34} parent=5 // pred_region
      %s196 = ssub.s32 %s10, 1
      %p197 = scmp.lt.s32.totalorder %s15, 1
      %s198 = scalar_select %p197, %s15, 1
      %s199 = smul.addr %s198, 4
      %s200 = smul.addr %s199, 8
      %s201 = scalar_lea.vmem %s0, %s200
      %p202 = pneg %p36
      %p203 = pneg %p33
      %p204 = scmp.lt.s32.totalorder %s15, 1
      %s205 = scalar_select %p204, %s15, 1
      %s206 = smul.addr %s205, 4
      %s207 = smul.addr %s206, 8
      %s208 = scalar_lea.vmem %s1, %s207
      %p209 = pneg %p62
      %p210 = pneg %p59
      %p211 = scmp.lt.s32.totalorder %s15, 1
      %s212 = scalar_select %p211, %s15, 1
      %s213 = smul.addr %s212, 4
      %s214 = smul.addr %s213, 8
      %s215 = scalar_lea.vmem %s2, %s214
      %p216 = pneg %p88
      %p217 = pneg %p85
      %p218 = scmp.lt.s32.totalorder %s15, 1
      %s219 = scalar_select %p218, %s15, 1
      %s220 = smul.addr %s219, 8
      %s221 = scalar_lea.vmem %s3, %s220
      %p222 = pneg %p114
      %p223 = pneg %p111
      %p224 = pneg %p140
      %p225 = pneg %p137
      %p226 = scmp.lt.s32.totalorder %s15, 1
      %s227 = scalar_select %p226, %s15, 1
      %s228 = smul.addr %s227, 4
      %s229 = smul.addr %s228, 8
      %s230 = scalar_lea.vmem %s4, %s229
      %p231 = scmp.lt.s32.totalorder %s15, 1
      %s232 = scalar_select %p231, %s15, 1
      %s233 = smul.addr %s232, 4
      %s234 = smul.addr %s233, 8
      %s235 = scalar_lea.vmem %s0, %s234
      %p236 = scmp.lt.s32.totalorder %s15, 1
      %s237 = scalar_select %p236, %s15, 1
      %s238 = smul.addr %s237, 4
      %s239 = smul.addr %s238, 8
      %s240 = scalar_lea.vmem %s1, %s239
      %p241 = scmp.lt.s32.totalorder %s15, 1
      %s242 = scalar_select %p241, %s15, 1
      %s243 = smul.addr %s242, 4
      %s244 = smul.addr %s243, 8
      %s245 = scalar_lea.vmem %s2, %s244
      %p246 = scmp.lt.s32.totalorder %s15, 1
      %s247 = scalar_select %p246, %s15, 1
      %s248 = smul.addr %s247, 8
      %s249 = scalar_lea.vmem %s3, %s248
      %p250 = scmp.lt.s32.totalorder %s15, 1
      %s251 = scalar_select %p250, %s15, 1
      %s252 = smul.addr %s251, 4
      %s253 = smul.addr %s252, 8
      %s254 = scalar_lea.vmem %s4, %s253
      %v256 = vld [vmem:[%s235] sm:$0xff]
      %v257 = vld [vmem:[%s235 + $0x8] sm:$0xff]
      %v258 = vld [vmem:[%s235 + $0x10] sm:$0xff]
      %v259 = vld [vmem:[%s235 + $0x18] sm:$0xff]
      %v260 = vpack.c.bf16 %v256, %v256
      %v261 = vpack.c.bf16 %v257, %v257
      %v262 = vpack.c.bf16 %v258, %v258
      %v263 = vpack.c.bf16 %v259, %v259
      %v264 = vld [vmem:[%s240] sm:$0xff]
      %v265 = vld [vmem:[%s240 + $0x8] sm:$0xff]
      %v266 = vld [vmem:[%s240 + $0x10] sm:$0xff]
      %v267 = vld [vmem:[%s240 + $0x18] sm:$0xff]
      %v268 = vpack.c.bf16 %v264, %v264
      %v269 = vpack.c.bf16 %v265, %v265
      %v270 = vpack.c.bf16 %v266, %v266
      %v271 = vpack.c.bf16 %v267, %v267
      %v272 = vld [vmem:[%s245] sm:$0xff]
      %v273 = vld [vmem:[%s245 + $0x8] sm:$0xff]
      %v274 = vld [vmem:[%s245 + $0x10] sm:$0xff]
      %v275 = vld [vmem:[%s245 + $0x18] sm:$0xff]
      %v276 = vpack.c.bf16 %v272, %v272
      %v277 = vpack.c.bf16 %v273, %v273
      %v278 = vpack.c.bf16 %v274, %v274
      %v279 = vpack.c.bf16 %v275, %v275
      %v280 = vld [vmem:[%s249] sm:$0xff]
      %vm281 = vcmask 64512
      %v283 = vsel %vm281, %v260, 0
      %v286 = vsel %vm281, %v268, 0
      %288 = vmatprep.subr.bf16.mxu0 0
      %289 = vmatpush1.bf16.xpose.msra.mxu0 %v286
      %290 = vmatprep.subr.bf16.mxu0 0
      %291 = vmatpush1.bf16.xpose.msra.mxu0 0
      %292 = vmatprep.subr.bf16.mxu0 0
      %293 = vmatpush1.bf16.xpose.msra.mxu0 0
      %294 = vmatprep.subr.bf16.mxu0 0
      %295 = vmatpush1.bf16.xpose.msra.mxu0 0
      %296 = vmatprep.subr.bf16.mxu0 0
      %297 = vmatpush1.bf16.xpose.msra.mxu0 0
      %298 = vmatprep.subr.bf16.mxu0 0
      %299 = vmatpush1.bf16.xpose.msra.mxu0 0
      %300 = vmatprep.subr.bf16.mxu0 0
      %301 = vmatpush1.bf16.xpose.msra.mxu0 0
      %302 = vmatprep.subr.bf16.mxu0 0
      %303 = vmatpush1.bf16.xpose.msra.mxu0 0
      %304 = vmatprep.subr.bf16.mxu0 0
      %305 = vmatpush1.bf16.xpose.msra.mxu0 0
      %306 = vmatprep.subr.bf16.mxu0 0
      %307 = vmatpush1.bf16.xpose.msra.mxu0 0
      %308 = vmatprep.subr.bf16.mxu0 0
      %309 = vmatpush1.bf16.xpose.msra.mxu0 0
      %310 = vmatprep.subr.bf16.mxu0 0
      %311 = vmatpush1.bf16.xpose.msra.mxu0 0
      %312 = vmatprep.subr.bf16.mxu0 0
      %313 = vmatpush1.bf16.xpose.msra.mxu0 0
      %314 = vmatprep.subr.bf16.mxu0 0
      %315 = vmatpush1.bf16.xpose.msra.mxu0 0
      %316 = vmatprep.subr.bf16.mxu0 0
      %317 = vmatpush1.bf16.xpose.msra.mxu0 0
      %318 = vmatprep.subr.bf16.mxu0 0
      %319 = vmatpush1.bf16.xpose.msra.mxu0 0
      %320 = vmatprep.mubr.bf16.mxu0 0
      %321 = vmatmul.mubr.bf16.gmra.mrb[0].mxu0 %v283
      %v322 = vpop.f32.mrb[0].mxu0
      %v323 = vadd.f32 0.0, %v322
      %v324 = vpop.f32.mrb[0].mxu0
      %v325 = vpop.f32.mrb[0].mxu0
      %v326 = vpop.f32.mrb[0].mxu0
      %327 = vdwg.mxu0
      %v329 = vsel %vm281, %v261, 0
      %v332 = vsel %vm281, %v269, 0
      %334 = vmatprep.subr.bf16.mxu0 0
      %335 = vmatpush1.bf16.xpose.msra.mxu0 %v332
      %336 = vmatprep.subr.bf16.mxu0 0
      %337 = vmatpush1.bf16.xpose.msra.mxu0 0
      %338 = vmatprep.subr.bf16.mxu0 0
      %339 = vmatpush1.bf16.xpose.msra.mxu0 0
      %340 = vmatprep.subr.bf16.mxu0 0
      %341 = vmatpush1.bf16.xpose.msra.mxu0 0
      %342 = vmatprep.subr.bf16.mxu0 0
      %343 = vmatpush1.bf16.xpose.msra.mxu0 0
      %344 = vmatprep.subr.bf16.mxu0 0
      %345 = vmatpush1.bf16.xpose.msra.mxu0 0
      %346 = vmatprep.subr.bf16.mxu0 0
      %347 = vmatpush1.bf16.xpose.msra.mxu0 0
      %348 = vmatprep.subr.bf16.mxu0 0
      %349 = vmatpush1.bf16.xpose.msra.mxu0 0
      %350 = vmatprep.subr.bf16.mxu0 0
      %351 = vmatpush1.bf16.xpose.msra.mxu0 0
      %352 = vmatprep.subr.bf16.mxu0 0
      %353 = vmatpush1.bf16.xpose.msra.mxu0 0
      %354 = vmatprep.subr.bf16.mxu0 0
      %355 = vmatpush1.bf16.xpose.msra.mxu0 0
      %356 = vmatprep.subr.bf16.mxu0 0
      %357 = vmatpush1.bf16.xpose.msra.mxu0 0
      %358 = vmatprep.subr.bf16.mxu0 0
      %359 = vmatpush1.bf16.xpose.msra.mxu0 0
      %360 = vmatprep.subr.bf16.mxu0 0
      %361 = vmatpush1.bf16.xpose.msra.mxu0 0
      %362 = vmatprep.subr.bf16.mxu0 0
      %363 = vmatpush1.bf16.xpose.msra.mxu0 0
      %364 = vmatprep.subr.bf16.mxu0 0
      %365 = vmatpush1.bf16.xpose.msra.mxu0 0
      %366 = vmatprep.mubr.bf16.mxu0 0
      %367 = vmatmul.mubr.bf16.gmra.mrb[0].mxu0 %v329
      %v368 = vpop.f32.mrb[0].mxu0
      %v369 = vadd.f32 0.0, %v368
      %v370 = vpop.f32.mrb[0].mxu0
      %v371 = vpop.f32.mrb[0].mxu0
      %v372 = vpop.f32.mrb[0].mxu0
      %373 = vdwg.mxu0
      %v375 = vsel %vm281, %v262, 0
      %v378 = vsel %vm281, %v270, 0
      %380 = vmatprep.subr.bf16.mxu0 0
      %381 = vmatpush1.bf16.xpose.msra.mxu0 %v378
      %382 = vmatprep.subr.bf16.mxu0 0
      %383 = vmatpush1.bf16.xpose.msra.mxu0 0
      %384 = vmatprep.subr.bf16.mxu0 0
      %385 = vmatpush1.bf16.xpose.msra.mxu0 0
      %386 = vmatprep.subr.bf16.mxu0 0
      %387 = vmatpush1.bf16.xpose.msra.mxu0 0
      %388 = vmatprep.subr.bf16.mxu0 0
      %389 = vmatpush1.bf16.xpose.msra.mxu0 0
      %390 = vmatprep.subr.bf16.mxu0 0
      %391 = vmatpush1.bf16.xpose.msra.mxu0 0
      %392 = vmatprep.subr.bf16.mxu0 0
      %393 = vmatpush1.bf16.xpose.msra.mxu0 0
      %394 = vmatprep.subr.bf16.mxu0 0
      %395 = vmatpush1.bf16.xpose.msra.mxu0 0
      %396 = vmatprep.subr.bf16.mxu0 0
      %397 = vmatpush1.bf16.xpose.msra.mxu0 0
      %398 = vmatprep.subr.bf16.mxu0 0
      %399 = vmatpush1.bf16.xpose.msra.mxu0 0
      %400 = vmatprep.subr.bf16.mxu0 0
      %401 = vmatpush1.bf16.xpose.msra.mxu0 0
      %402 = vmatprep.subr.bf16.mxu0 0
      %403 = vmatpush1.bf16.xpose.msra.mxu0 0
      %404 = vmatprep.subr.bf16.mxu0 0
      %405 = vmatpush1.bf16.xpose.msra.mxu0 0
      %406 = vmatprep.subr.bf16.mxu0 0
      %407 = vmatpush1.bf16.xpose.msra.mxu0 0
      %408 = vmatprep.subr.bf16.mxu0 0
      %409 = vmatpush1.bf16.xpose.msra.mxu0 0
      %410 = vmatprep.subr.bf16.mxu0 0
      %411 = vmatpush1.bf16.xpose.msra.mxu0 0
      %412 = vmatprep.mubr.bf16.mxu0 0
      %413 = vmatmul.mubr.bf16.gmra.mrb[0].mxu0 %v375
      %v414 = vpop.f32.mrb[0].mxu0
      %v415 = vadd.f32 0.0, %v414
      %v416 = vpop.f32.mrb[0].mxu0
      %v417 = vpop.f32.mrb[0].mxu0
      %v418 = vpop.f32.mrb[0].mxu0
      %419 = vdwg.mxu0
      %v421 = vsel %vm281, %v263, 0
      %v424 = vsel %vm281, %v271, 0
      %426 = vmatprep.subr.bf16.mxu0 0
      %427 = vmatpush1.bf16.xpose.msra.mxu0 %v424
      %428 = vmatprep.subr.bf16.mxu0 0
      %429 = vmatpush1.bf16.xpose.msra.mxu0 0
      %430 = vmatprep.subr.bf16.mxu0 0
      %431 = vmatpush1.bf16.xpose.msra.mxu0 0
      %432 = vmatprep.subr.bf16.mxu0 0
      %433 = vmatpush1.bf16.xpose.msra.mxu0 0
      %434 = vmatprep.subr.bf16.mxu0 0
      %435 = vmatpush1.bf16.xpose.msra.mxu0 0
      %436 = vmatprep.subr.bf16.mxu0 0
      %437 = vmatpush1.bf16.xpose.msra.mxu0 0
      %438 = vmatprep.subr.bf16.mxu0 0
      %439 = vmatpush1.bf16.xpose.msra.mxu0 0
      %440 = vmatprep.subr.bf16.mxu0 0
      %441 = vmatpush1.bf16.xpose.msra.mxu0 0
      %442 = vmatprep.subr.bf16.mxu0 0
      %443 = vmatpush1.bf16.xpose.msra.mxu0 0
      %444 = vmatprep.subr.bf16.mxu0 0
      %445 = vmatpush1.bf16.xpose.msra.mxu0 0
      %446 = vmatprep.subr.bf16.mxu0 0
      %447 = vmatpush1.bf16.xpose.msra.mxu0 0
      %448 = vmatprep.subr.bf16.mxu0 0
      %449 = vmatpush1.bf16.xpose.msra.mxu0 0
      %450 = vmatprep.subr.bf16.mxu0 0
      %451 = vmatpush1.bf16.xpose.msra.mxu0 0
      %452 = vmatprep.subr.bf16.mxu0 0
      %453 = vmatpush1.bf16.xpose.msra.mxu0 0
      %454 = vmatprep.subr.bf16.mxu0 0
      %455 = vmatpush1.bf16.xpose.msra.mxu0 0
      %456 = vmatprep.subr.bf16.mxu0 0
      %457 = vmatpush1.bf16.xpose.msra.mxu0 0
      %458 = vmatprep.mubr.bf16.mxu0 0
      %459 = vmatmul.mubr.bf16.gmra.mrb[0].mxu0 %v421
      %v460 = vpop.f32.mrb[0].mxu0
      %v461 = vadd.f32 0.0, %v460
      %v462 = vpop.f32.mrb[0].mxu0
      %v463 = vpop.f32.mrb[0].mxu0
      %v464 = vpop.f32.mrb[0].mxu0
      %465 = vdwg.mxu0
      %v466 = vmul.f32 %v323, 0.35355338
      %v467 = vmul.f32 %v369, 0.35355338
      %v468 = vmul.f32 %v415, 0.35355338
      %v469 = vmul.f32 %v461, 0.35355338
      %vm470 = vcmp.gt.f32.partialorder %v280, 0.5
      %v471 = vsel %vm470, 1, 0
      %vm472 = vcmp.eq.s32.totalorder %v471, 1
      %v473 = vsel %vm472, %v466, -10000.0
      %v474 = vsel %vm472, %v467, -10000.0
      %v475 = vsel %vm472, %v468, -10000.0
      %v476 = vsel %vm472, %v469, -10000.0
      %v477 = vsel %vm281, %v473, -inf
      %478 = vmax.xlane.f32.xlu0 %v477
      %v479 = vpop.xlane.xlu0 %478
      %v480 = vsel %vm281, %v474, -inf
      %481 = vmax.xlane.f32.xlu0 %v480
      %v482 = vpop.xlane.xlu0 %481
      %v483 = vsel %vm281, %v475, -inf
      %484 = vmax.xlane.f32.xlu0 %v483
      %v485 = vpop.xlane.xlu0 %484
      %v486 = vsel %vm281, %v476, -inf
      %487 = vmax.xlane.f32.xlu0 %v486
      %v488 = vpop.xlane.xlu0 %487
      %v489 = vsub.f32 %v473, %v479
      %v490 = vsub.f32 %v474, %v482
      %v491 = vsub.f32 %v475, %v485
      %v492 = vsub.f32 %v476, %v488
      %v493 = vmul.f32 %v489, 1.442695
      %v494 = vpow.pop %v493
      %v495 = vmul.f32 %v490, 1.442695
      %v496 = vpow.pop %v495
      %v497 = vmul.f32 %v491, 1.442695
      %v498 = vpow.pop %v497
      %v499 = vmul.f32 %v492, 1.442695
      %v500 = vpow.pop %v499
      %v501 = vsel %vm281, %v494, 0.0
      %502 = vadd.xlane.f32.xlu0 %v501
      %v503 = vpop.xlane.xlu0 %502
      %v504 = vsel %vm281, %v496, 0.0
      %505 = vadd.xlane.f32.xlu0 %v504
      %v506 = vpop.xlane.xlu0 %505
      %v507 = vsel %vm281, %v498, 0.0
      %508 = vadd.xlane.f32.xlu0 %v507
      %v509 = vpop.xlane.xlu0 %508
      %v510 = vsel %vm281, %v500, 0.0
      %511 = vadd.xlane.f32.xlu0 %v510
      %v512 = vpop.xlane.xlu0 %511
      %v513 = vrcp.pop %v503
      %v514 = vrcp.pop %v506
      %v515 = vrcp.pop %v509
      %v516 = vrcp.pop %v512
      %v517 = vmul.f32 %v494, %v513
      %v518 = vmul.f32 %v496, %v514
      %v519 = vmul.f32 %v498, %v515
      %v520 = vmul.f32 %v500, %v516
      %v521 = vpack.c.bf16 %v517, %v517
      %v522 = vpack.c.bf16 %v518, %v518
      %v523 = vpack.c.bf16 %v519, %v519
      %v524 = vpack.c.bf16 %v520, %v520
      %v526 = vsel %vm281, %v521, 0
      %vm528 = vcmask 1043456
      %v530 = vsel %vm528, %v276, 0
      %532 = vmatprep.subr.bf16.mxu0 0
      %533 = vmatpush1.bf16.msra.mxu0 %v530
      %534 = vmatprep.subr.bf16.mxu0 0
      %535 = vmatpush1.bf16.msra.mxu0 0
      %536 = vmatprep.subr.bf16.mxu0 0
      %537 = vmatpush1.bf16.msra.mxu0 0
      %538 = vmatprep.subr.bf16.mxu0 0
      %539 = vmatpush1.bf16.msra.mxu0 0
      %540 = vmatprep.subr.bf16.mxu0 0
      %541 = vmatpush1.bf16.msra.mxu0 0
      %542 = vmatprep.subr.bf16.mxu0 0
      %543 = vmatpush1.bf16.msra.mxu0 0
      %544 = vmatprep.subr.bf16.mxu0 0
      %545 = vmatpush1.bf16.msra.mxu0 0
      %546 = vmatprep.subr.bf16.mxu0 0
      %547 = vmatpush1.bf16.msra.mxu0 0
      %548 = vmatprep.subr.bf16.mxu0 0
      %549 = vmatpush1.bf16.msra.mxu0 0
      %550 = vmatprep.subr.bf16.mxu0 0
      %551 = vmatpush1.bf16.msra.mxu0 0
      %552 = vmatprep.subr.bf16.mxu0 0
      %553 = vmatpush1.bf16.msra.mxu0 0
      %554 = vmatprep.subr.bf16.mxu0 0
      %555 = vmatpush1.bf16.msra.mxu0 0
      %556 = vmatprep.subr.bf16.mxu0 0
      %557 = vmatpush1.bf16.msra.mxu0 0
      %558 = vmatprep.subr.bf16.mxu0 0
      %559 = vmatpush1.bf16.msra.mxu0 0
      %560 = vmatprep.subr.bf16.mxu0 0
      %561 = vmatpush1.bf16.msra.mxu0 0
      %562 = vmatprep.subr.bf16.mxu0 0
      %563 = vmatpush1.bf16.msra.mxu0 0
      %564 = vmatprep.mubr.bf16.mxu0 0
      %565 = vmatmul.mubr.bf16.gmra.mrb[0].mxu0 %v526
      %v566 = vpop.f32.mrb[0].mxu0
      %v567 = vadd.f32 0.0, %v566
      %v568 = vpop.f32.mrb[0].mxu0
      %v569 = vpop.f32.mrb[0].mxu0
      %v570 = vpop.f32.mrb[0].mxu0
      %571 = vdwg.mxu0
      %v573 = vsel %vm281, %v522, 0
      %v576 = vsel %vm528, %v277, 0
      %578 = vmatprep.subr.bf16.mxu0 0
      %579 = vmatpush1.bf16.msra.mxu0 %v576
      %580 = vmatprep.subr.bf16.mxu0 0
      %581 = vmatpush1.bf16.msra.mxu0 0
      %582 = vmatprep.subr.bf16.mxu0 0
      %583 = vmatpush1.bf16.msra.mxu0 0
      %584 = vmatprep.subr.bf16.mxu0 0
      %585 = vmatpush1.bf16.msra.mxu0 0
      %586 = vmatprep.subr.bf16.mxu0 0
      %587 = vmatpush1.bf16.msra.mxu0 0
      %588 = vmatprep.subr.bf16.mxu0 0
      %589 = vmatpush1.bf16.msra.mxu0 0
      %590 = vmatprep.subr.bf16.mxu0 0
      %591 = vmatpush1.bf16.msra.mxu0 0
      %592 = vmatprep.subr.bf16.mxu0 0
      %593 = vmatpush1.bf16.msra.mxu0 0
      %594 = vmatprep.subr.bf16.mxu0 0
      %595 = vmatpush1.bf16.msra.mxu0 0
      %596 = vmatprep.subr.bf16.mxu0 0
      %597 = vmatpush1.bf16.msra.mxu0 0
      %598 = vmatprep.subr.bf16.mxu0 0
      %599 = vmatpush1.bf16.msra.mxu0 0
      %600 = vmatprep.subr.bf16.mxu0 0
      %601 = vmatpush1.bf16.msra.mxu0 0
      %602 = vmatprep.subr.bf16.mxu0 0
      %603 = vmatpush1.bf16.msra.mxu0 0
      %604 = vmatprep.subr.bf16.mxu0 0
      %605 = vmatpush1.bf16.msra.mxu0 0
      %606 = vmatprep.subr.bf16.mxu0 0
      %607 = vmatpush1.bf16.msra.mxu0 0
      %608 = vmatprep.subr.bf16.mxu0 0
      %609 = vmatpush1.bf16.msra.mxu0 0
      %610 = vmatprep.mubr.bf16.mxu0 0
      %611 = vmatmul.mubr.bf16.gmra.mrb[0].mxu0 %v573
      %v612 = vpop.f32.mrb[0].mxu0
      %v613 = vadd.f32 0.0, %v612
      %v614 = vpop.f32.mrb[0].mxu0
      %v615 = vpop.f32.mrb[0].mxu0
      %v616 = vpop.f32.mrb[0].mxu0
      %617 = vdwg.mxu0
      %v619 = vsel %vm281, %v523, 0
      %v622 = vsel %vm528, %v278, 0
      %624 = vmatprep.subr.bf16.mxu0 0
      %625 = vmatpush1.bf16.msra.mxu0 %v622
      %626 = vmatprep.subr.bf16.mxu0 0
      %627 = vmatpush1.bf16.msra.mxu0 0
      %628 = vmatprep.subr.bf16.mxu0 0
      %629 = vmatpush1.bf16.msra.mxu0 0
      %630 = vmatprep.subr.bf16.mxu0 0
      %631 = vmatpush1.bf16.msra.mxu0 0
      %632 = vmatprep.subr.bf16.mxu0 0
      %633 = vmatpush1.bf16.msra.mxu0 0
      %634 = vmatprep.subr.bf16.mxu0 0
      %635 = vmatpush1.bf16.msra.mxu0 0
      %636 = vmatprep.subr.bf16.mxu0 0
      %637 = vmatpush1.bf16.msra.mxu0 0
      %638 = vmatprep.subr.bf16.mxu0 0
      %639 = vmatpush1.bf16.msra.mxu0 0
      %640 = vmatprep.subr.bf16.mxu0 0
      %641 = vmatpush1.bf16.msra.mxu0 0
      %642 = vmatprep.subr.bf16.mxu0 0
      %643 = vmatpush1.bf16.msra.mxu0 0
      %644 = vmatprep.subr.bf16.mxu0 0
      %645 = vmatpush1.bf16.msra.mxu0 0
      %646 = vmatprep.subr.bf16.mxu0 0
      %647 = vmatpush1.bf16.msra.mxu0 0
      %648 = vmatprep.subr.bf16.mxu0 0
      %649 = vmatpush1.bf16.msra.mxu0 0
      %650 = vmatprep.subr.bf16.mxu0 0
      %651 = vmatpush1.bf16.msra.mxu0 0
      %652 = vmatprep.subr.bf16.mxu0 0
      %653 = vmatpush1.bf16.msra.mxu0 0
      %654 = vmatprep.subr.bf16.mxu0 0
      %655 = vmatpush1.bf16.msra.mxu0 0
      %656 = vmatprep.mubr.bf16.mxu0 0
      %657 = vmatmul.mubr.bf16.gmra.mrb[0].mxu0 %v619
      %v658 = vpop.f32.mrb[0].mxu0
      %v659 = vadd.f32 0.0, %v658
      %v660 = vpop.f32.mrb[0].mxu0
      %v661 = vpop.f32.mrb[0].mxu0
      %v662 = vpop.f32.mrb[0].mxu0
      %663 = vdwg.mxu0
      %v665 = vsel %vm281, %v524, 0
      %v668 = vsel %vm528, %v279, 0
      %670 = vmatprep.subr.bf16.mxu0 0
      %671 = vmatpush1.bf16.msra.mxu0 %v668
      %672 = vmatprep.subr.bf16.mxu0 0
      %673 = vmatpush1.bf16.msra.mxu0 0
      %674 = vmatprep.subr.bf16.mxu0 0
      %675 = vmatpush1.bf16.msra.mxu0 0
      %676 = vmatprep.subr.bf16.mxu0 0
      %677 = vmatpush1.bf16.msra.mxu0 0
      %678 = vmatprep.subr.bf16.mxu0 0
      %679 = vmatpush1.bf16.msra.mxu0 0
      %680 = vmatprep.subr.bf16.mxu0 0
      %681 = vmatpush1.bf16.msra.mxu0 0
      %682 = vmatprep.subr.bf16.mxu0 0
      %683 = vmatpush1.bf16.msra.mxu0 0
      %684 = vmatprep.subr.bf16.mxu0 0
      %685 = vmatpush1.bf16.msra.mxu0 0
      %686 = vmatprep.subr.bf16.mxu0 0
      %687 = vmatpush1.bf16.msra.mxu0 0
      %688 = vmatprep.subr.bf16.mxu0 0
      %689 = vmatpush1.bf16.msra.mxu0 0
      %690 = vmatprep.subr.bf16.mxu0 0
      %691 = vmatpush1.bf16.msra.mxu0 0
      %692 = vmatprep.subr.bf16.mxu0 0
      %693 = vmatpush1.bf16.msra.mxu0 0
      %694 = vmatprep.subr.bf16.mxu0 0
      %695 = vmatpush1.bf16.msra.mxu0 0
      %696 = vmatprep.subr.bf16.mxu0 0
      %697 = vmatpush1.bf16.msra.mxu0 0
      %698 = vmatprep.subr.bf16.mxu0 0
      %699 = vmatpush1.bf16.msra.mxu0 0
      %700 = vmatprep.subr.bf16.mxu0 0
      %701 = vmatpush1.bf16.msra.mxu0 0
      %702 = vmatprep.mubr.bf16.mxu0 0
      %703 = vmatmul.mubr.bf16.gmra.mrb[0].mxu0 %v665
      %v704 = vpop.f32.mrb[0].mxu0
      %v705 = vadd.f32 0.0, %v704
      %v706 = vpop.f32.mrb[0].mxu0
      %v707 = vpop.f32.mrb[0].mxu0
      %v708 = vpop.f32.mrb[0].mxu0
      %709 = vdwg.mxu0
      %710 = vst.msk [vmem:[%s254] sm:$0xff] %vm281, %v567
      %711 = vst.msk [vmem:[%s254 + $0x8] sm:$0xff] %vm281, %v613
      %712 = vst.msk [vmem:[%s254 + $0x10] sm:$0xff] %vm281, %v659
      %713 = vst.msk [vmem:[%s254 + $0x18] sm:$0xff] %vm281, %v705
      %p714 = scmp.lt.s32.totalorder %s15, 1
      %s715 = scalar_select %p714, %s15, 1
      %s716 = smul.addr %s715, 4
      %s717 = smul.addr %s716, 8
      %s718 = scalar_lea.vmem %s4, %s717
      // Predicated region
      $region37: #{transformer_forward.34} parent=35 // pred_check
        %p719 = pneg %p137
      $region38: #{transformer_forward.34} parent=35 // pred_check_branch
        %721 = sbr.rel (%p719) target = $region40
      $region39: #{transformer_forward.34} parent=35 // pred_region
        _
      $region40: #{transformer_forward.34} parent=35 // pred_fallthru
        _
    $region36: #{transformer_forward.34} parent=5 // pred_fallthru
      _
    %p722 = scmp.le.s32.totalorder 2, %s10
    // Predicated region
    $region41: #{transformer_forward.34} parent=5 // pred_check
      %p723 = pneg %p722
    $region42: #{transformer_forward.34} parent=5 // pred_check_branch
      %725 = sbr.rel (%p723) target = $region44
    $region43: #{transformer_forward.34} parent=5 // pred_region
      %s726 = ssub.s32 %s10, 2
      // Predicated region
      $region45: #{transformer_forward.34} parent=43 // pred_check
        %p727 = pneg %p143
      $region46: #{transformer_forward.34} parent=43 // pred_check_branch
        %729 = sbr.rel (%p727) target = $region48
      $region47: #{transformer_forward.34} parent=43 // pred_region
        %p730 = scmp.lt.s32.totalorder %s16, 1
        %s731 = scalar_select %p730, %s16, 1
        %s732 = smul.addr %s731, 4
        %s733 = smul.addr %s732, 8
        %s734 = scalar_lea.vmem %s4, %s733
      $region48: #{transformer_forward.34} parent=43 // pred_fallthru
        _
    $region44: #{transformer_forward.34} parent=5 // pred_fallthru
      _
  $region6: #{transformer_forward.34} parent=0 // loop_footer
    %s14 = sadd.s32 1, %s10
  $region7: #{transformer_forward.34} parent=0 // loop_footer_branch
    %9 = sbr.rel target = $region3
  $region8: #{transformer_forward.34} parent=0 // loop_exit
    _

// kernel: transformer_forward.37
$region0: #{transformer_forward.37}
  #allocation0 [shape = 'u32[]', space=smem, size = 0x4, offset = 0x4, fixed_abs, tag = 'smem constant byte address 0x4 - core index']
  #allocation1 [shape = 'u32[144,128]{1,0:T(1,128)}', space=vmem, size = 0x12000, scoped, tag = 'internal scratch']
  #allocation2 [shape = 'f32[16,64]{1,0:T(8,128)}', space=vmem, size = 0x2000, scoped, tag = 'scratch operand']
  %s0 = inlined_call_operand.vmem [shape: f32[16,32], index: 0, kind: input, shape index: {}]
  %s1 = inlined_call_operand.vmem [shape: bf16[32,64], index: 1, kind: input, shape index: {}]
  %s2 = inlined_call_operand.vmem [shape: f32[1,64], index: 2, kind: input, shape index: {}]
  %s3 = inlined_call_operand.vmem [shape: f32[16,64], index: 3, kind: output, shape index: {}]
  %s4 = sld [smem:[#allocation0]]
  $region30: #{transformer_forward.37} parent=0
    _
  %s6 = ssub.s32 1, %s4
  %s7 = scalar_select 0, %s6, %s4
  // Predicated region
  $region2: #{transformer_forward.37} parent=0 // pred_check
    _
  $region3: #{transformer_forward.37} parent=0 // pred_check_branch
    %9 = sbr.rel (0) target = $region5
  $region4: #{transformer_forward.37} parent=0 // pred_region
    _
  $region5: #{transformer_forward.37} parent=0 // pred_fallthru
    _
  // Predicated region
  $region6: #{transformer_forward.37} parent=0 // pred_check
    _
  $region7: #{transformer_forward.37} parent=0 // pred_check_branch
    %11 = sbr.rel (0) target = $region9
  $region8: #{transformer_forward.37} parent=0 // pred_region
    _
  $region9: #{transformer_forward.37} parent=0 // pred_fallthru
    _
  // Predicated region
  $region10: #{transformer_forward.37} parent=0 // pred_check
    _
  $region11: #{transformer_forward.37} parent=0 // pred_check_branch
    %13 = sbr.rel (0) target = $region13
  $region12: #{transformer_forward.37} parent=0 // pred_region
    _
  $region13: #{transformer_forward.37} parent=0 // pred_fallthru
    _
  %p15 = scmp.eq.s32.totalorder 0, 0
  // Predicated region
  $region14: #{transformer_forward.37} parent=0 // pred_check
    %p16 = pneg %p15
  $region15: #{transformer_forward.37} parent=0 // pred_check_branch
    %18 = sbr.rel (%p16) target = $region17
  $region16: #{transformer_forward.37} parent=0 // pred_region
    %vm19 = vcmask 523264
    %20 = vst.msk [vmem:[#allocation2] sm:$0xff] %vm19, 0.0
    %21 = vst.msk [vmem:[#allocation2 + $0x8] sm:$0xff] %vm19, 0.0
  $region17: #{transformer_forward.37} parent=0 // pred_fallthru
    _
  %v22 = vld [vmem:[#allocation2] sm:$0xff]
  %v23 = vld [vmem:[#allocation2 + $0x8] sm:$0xff]
  %v24 = vld [vmem:[%s0] sm:$0xff]
  %v25 = vld [vmem:[%s0 + $0x8] sm:$0xff]
  %v26 = vpack.c.bf16 %v25, %v24
  %v27 = vld [vmem:[%s1] sm:$0xf]
  %v28 = vld [vmem:[%s1 + $0x4] sm:$0xf]
  %v29 = vld [vmem:[%s1 + $0x8] sm:$0xf]
  %v30 = vld [vmem:[%s1 + $0xc] sm:$0xf]
  %v35 = vunpack.c.l.b16 %v27
  %v36 = vunpack.c.l.b16 %v28
  %v37 = vunpack.c.l.b16 %v29
  %v38 = vunpack.c.l.b16 %v30
  %v39 = vpack.c.b16 %v36, %v35
  %v40 = vpack.c.b16 %v38, %v37
  %vm43 = vcmask 261120
  %v45 = vsel %vm43, %v26, 0
  %47 = vmatprep.subr.bf16.mxu0 0
  %48 = vmatpush1.bf16.msra.mxu0 %v39
  %49 = vmatprep.subr.bf16.mxu0 0
  %50 = vmatpush1.bf16.msra.mxu0 %v40
  %51 = vmatprep.subr.bf16.mxu0 0
  %52 = vmatpush1.bf16.msra.mxu0 0
  %53 = vmatprep.subr.bf16.mxu0 0
  %54 = vmatpush1.bf16.msra.mxu0 0
  %55 = vmatprep.subr.bf16.mxu0 0
  %56 = vmatpush1.bf16.msra.mxu0 0
  %57 = vmatprep.subr.bf16.mxu0 0
  %58 = vmatpush1.bf16.msra.mxu0 0
  %59 = vmatprep.subr.bf16.mxu0 0
  %60 = vmatpush1.bf16.msra.mxu0 0
  %61 = vmatprep.subr.bf16.mxu0 0
  %62 = vmatpush1.bf16.msra.mxu0 0
  %63 = vmatprep.subr.bf16.mxu0 0
  %64 = vmatpush1.bf16.msra.mxu0 0
  %65 = vmatprep.subr.bf16.mxu0 0
  %66 = vmatpush1.bf16.msra.mxu0 0
  %67 = vmatprep.subr.bf16.mxu0 0
  %68 = vmatpush1.bf16.msra.mxu0 0
  %69 = vmatprep.subr.bf16.mxu0 0
  %70 = vmatpush1.bf16.msra.mxu0 0
  %71 = vmatprep.subr.bf16.mxu0 0
  %72 = vmatpush1.bf16.msra.mxu0 0
  %73 = vmatprep.subr.bf16.mxu0 0
  %74 = vmatpush1.bf16.msra.mxu0 0
  %75 = vmatprep.subr.bf16.mxu0 0
  %76 = vmatpush1.bf16.msra.mxu0 0
  %77 = vmatprep.subr.bf16.mxu0 0
  %78 = vmatpush1.bf16.msra.mxu0 0
  %79 = vmatprep.mubr.bf16.mxu0 0
  %80 = vmatmul.mubr.bf16.gmra.mrb[0].mxu0 %v45
  %v81 = vpop.f32.mrb[0].mxu0
  %v82 = vadd.f32 0.0, %v81
  %v83 = vpop.f32.mrb[0].mxu0
  %v84 = vpop.f32.mrb[0].mxu0
  %v85 = vadd.f32 0.0, %v84
  %v86 = vpop.f32.mrb[0].mxu0
  %87 = vdwg.mxu0
  %v88 = vadd.f32 %v22, %v82
  %v89 = vadd.f32 %v23, %v85
  %vm90 = vcmask 523264
  %91 = vst.msk [vmem:[#allocation2] sm:$0xff] %vm90, %v88
  %92 = vst.msk [vmem:[#allocation2 + $0x8] sm:$0xff] %vm90, %v89
  // Predicated region
  $region18: #{transformer_forward.37} parent=0 // pred_check
    %p93 = pneg %p15
  $region19: #{transformer_forward.37} parent=0 // pred_check_branch
    %95 = sbr.rel (%p93) target = $region21
  $region20: #{transformer_forward.37} parent=0 // pred_region
    %v96 = vld [vmem:[#allocation2] sm:$0xff]
    %v97 = vld [vmem:[#allocation2 + $0x8] sm:$0xff]
    %v98 = vld [vmem:[%s2] sm:$0x1]
    %v100 = vlaneseq
    %v101 = vshrl.u32 %v100, 7
    %v102 = vsub.s32 0, %v101
    %v103 = vrot.slane %v98, %v102
    %v105 = vadd.f32 %v96, %v103
    %v106 = vadd.f32 %v97, %v103
    %107 = vst.msk [vmem:[%s3] sm:$0xff] %vm90, %v105
    %108 = vst.msk [vmem:[%s3 + $0x8] sm:$0xff] %vm90, %v106
  $region21: #{transformer_forward.37} parent=0 // pred_fallthru
    _
  // Predicated region
  $region22: #{transformer_forward.37} parent=0 // pred_check
    _
  $region23: #{transformer_forward.37} parent=0 // pred_check_branch
    %110 = sbr.rel (0) target = $region25
  $region24: #{transformer_forward.37} parent=0 // pred_region
    _
  $region25: #{transformer_forward.37} parent=0 // pred_fallthru
    _
  // Predicated region
  $region26: #{transformer_forward.37} parent=0 // pred_check
    _
  $region27: #{transformer_forward.37} parent=0 // pred_check_branch
    %112 = sbr.rel (0) target = $region29
  $region28: #{transformer_forward.37} parent=0 // pred_region
    _
  $region29: #{transformer_forward.37} parent=0 // pred_fallthru
    _

// kernel: transformer_forward.49
$region0: #{transformer_forward.49}
  #allocation0 [shape = 'u32[]', space=smem, size = 0x4, offset = 0x4, fixed_abs, tag = 'smem constant byte address 0x4 - core index']
  #allocation1 [shape = 'u32[144,128]{1,0:T(1,128)}', space=vmem, size = 0x12000, scoped, tag = 'internal scratch']
  #allocation2 [shape = 'f32[16,61]{1,0:T(8,128)}', space=vmem, size = 0x2000, scoped, tag = 'scratch operand']
  %s0 = inlined_call_operand.vmem [shape: f32[16,32], index: 0, kind: input, shape index: {}]
  %s1 = inlined_call_operand.vmem [shape: bf16[32,61], index: 1, kind: input, shape index: {}]
  %s2 = inlined_call_operand.vmem [shape: f32[1,61], index: 2, kind: input, shape index: {}]
  %s3 = inlined_call_operand.hbm [shape: f32[16,61], index: 3, kind: output, shape index: {}]
  %s4 = sld [smem:[#allocation0]]
  $region30: #{transformer_forward.49} parent=0
    _
  %s6 = ssub.s32 1, %s4
  %s7 = scalar_select 0, %s6, %s4
  $region1: #{transformer_forward.49} parent=0
    #allocation3 [shape = 'u8[8192]{0}', space=vmem, size = 0x2000, scoped, tag = 'output window, operand 0, single buffered']
    #allocation4 [shape = 's32[1]{0}', space=sflag, size = 0x4, scoped, tag = 'scoped memory for transformer_forward.49']
    %8 = vsyncpa [#allocation4], 0
    // Predicated region
    $region2: #{transformer_forward.49} parent=1 // pred_check
      _
    $region3: #{transformer_forward.49} parent=1 // pred_check_branch
      %10 = sbr.rel (0) target = $region5
    $region4: #{transformer_forward.49} parent=1 // pred_region
      _
    $region5: #{transformer_forward.49} parent=1 // pred_fallthru
      _
    // Predicated region
    $region6: #{transformer_forward.49} parent=1 // pred_check
      _
    $region7: #{transformer_forward.49} parent=1 // pred_check_branch
      %12 = sbr.rel (0) target = $region9
    $region8: #{transformer_forward.49} parent=1 // pred_region
      _
    $region9: #{transformer_forward.49} parent=1 // pred_fallthru
      _
    // Predicated region
    $region10: #{transformer_forward.49} parent=1 // pred_check
      _
    $region11: #{transformer_forward.49} parent=1 // pred_check_branch
      %14 = sbr.rel (0) target = $region13
    $region12: #{transformer_forward.49} parent=1 // pred_region
      _
    $region13: #{transformer_forward.49} parent=1 // pred_fallthru
      _
    %p16 = scmp.eq.s32.totalorder 0, 0
    // Predicated region
    $region14: #{transformer_forward.49} parent=1 // pred_check
      %p17 = pneg %p16
    $region15: #{transformer_forward.49} parent=1 // pred_check_branch
      %19 = sbr.rel (%p17) target = $region17
    $region16: #{transformer_forward.49} parent=1 // pred_region
      %vm20 = vcmask 498688
      %21 = vst.msk [vmem:[#allocation2] sm:$0xff] %vm20, 0.0
      %22 = vst.msk [vmem:[#allocation2 + $0x8] sm:$0xff] %vm20, 0.0
    $region17: #{transformer_forward.49} parent=1 // pred_fallthru
      _
    %v23 = vld [vmem:[#allocation2] sm:$0xff]
    %v24 = vld [vmem:[#allocation2 + $0x8] sm:$0xff]
    %v25 = vld [vmem:[%s0] sm:$0xff]
    %v26 = vld [vmem:[%s0 + $0x8] sm:$0xff]
    %v27 = vpack.c.bf16 %v26, %v25
    %v28 = vld [vmem:[%s1] sm:$0xf]
    %v29 = vld [vmem:[%s1 + $0x4] sm:$0xf]
    %v30 = vld [vmem:[%s1 + $0x8] sm:$0xf]
    %v31 = vld [vmem:[%s1 + $0xc] sm:$0xf]
    %v36 = vunpack.c.l.b16 %v28
    %v37 = vunpack.c.l.b16 %v29
    %v38 = vunpack.c.l.b16 %v30
    %v39 = vunpack.c.l.b16 %v31
    %v40 = vpack.c.b16 %v37, %v36
    %v41 = vpack.c.b16 %v39, %v38
    %vm44 = vcmask 261120
    %v46 = vsel %vm44, %v27, 0
    %48 = vmatprep.subr.bf16.mxu0 0
    %49 = vmatpush1.bf16.msra.mxu0 %v40
    %50 = vmatprep.subr.bf16.mxu0 0
    %51 = vmatpush1.bf16.msra.mxu0 %v41
    %52 = vmatprep.subr.bf16.mxu0 0
    %53 = vmatpush1.bf16.msra.mxu0 0
    %54 = vmatprep.subr.bf16.mxu0 0
    %55 = vmatpush1.bf16.msra.mxu0 0
    %56 = vmatprep.subr.bf16.mxu0 0
    %57 = vmatpush1.bf16.msra.mxu0 0
    %58 = vmatprep.subr.bf16.mxu0 0
    %59 = vmatpush1.bf16.msra.mxu0 0
    %60 = vmatprep.subr.bf16.mxu0 0
    %61 = vmatpush1.bf16.msra.mxu0 0
    %62 = vmatprep.subr.bf16.mxu0 0
    %63 = vmatpush1.bf16.msra.mxu0 0
    %64 = vmatprep.subr.bf16.mxu0 0
    %65 = vmatpush1.bf16.msra.mxu0 0
    %66 = vmatprep.subr.bf16.mxu0 0
    %67 = vmatpush1.bf16.msra.mxu0 0
    %68 = vmatprep.subr.bf16.mxu0 0
    %69 = vmatpush1.bf16.msra.mxu0 0
    %70 = vmatprep.subr.bf16.mxu0 0
    %71 = vmatpush1.bf16.msra.mxu0 0
    %72 = vmatprep.subr.bf16.mxu0 0
    %73 = vmatpush1.bf16.msra.mxu0 0
    %74 = vmatprep.subr.bf16.mxu0 0
    %75 = vmatpush1.bf16.msra.mxu0 0
    %76 = vmatprep.subr.bf16.mxu0 0
    %77 = vmatpush1.bf16.msra.mxu0 0
    %78 = vmatprep.subr.bf16.mxu0 0
    %79 = vmatpush1.bf16.msra.mxu0 0
    %80 = vmatprep.mubr.bf16.mxu0 0
    %81 = vmatmul.mubr.bf16.gmra.mrb[0].mxu0 %v46
    %v82 = vpop.f32.mrb[0].mxu0
    %v83 = vadd.f32 0.0, %v82
    %v84 = vpop.f32.mrb[0].mxu0
    %v85 = vpop.f32.mrb[0].mxu0
    %v86 = vadd.f32 0.0, %v85
    %v87 = vpop.f32.mrb[0].mxu0
    %88 = vdwg.mxu0
    %v89 = vadd.f32 %v23, %v83
    %v90 = vadd.f32 %v24, %v86
    %vm91 = vcmask 498688
    %92 = vst.msk [vmem:[#allocation2] sm:$0xff] %vm91, %v89
    %93 = vst.msk [vmem:[#allocation2 + $0x8] sm:$0xff] %vm91, %v90
    // Predicated region
    $region18: #{transformer_forward.49} parent=1 // pred_check
      %p94 = pneg %p16
    $region19: #{transformer_forward.49} parent=1 // pred_check_branch
      %96 = sbr.rel (%p94) target = $region21
    $region20: #{transformer_forward.49} parent=1 // pred_region
      %v97 = vld [vmem:[#allocation2] sm:$0xff]
      %v98 = vld [vmem:[#allocation2 + $0x8] sm:$0xff]
      %v99 = vld [vmem:[%s2] sm:$0x1]
      %v101 = vlaneseq
      %v102 = vshrl.u32 %v101, 7
      %v103 = vsub.s32 0, %v102
      %v104 = vrot.slane %v99, %v103
      %v106 = vadd.f32 %v97, %v104
      %v107 = vadd.f32 %v98, %v104
      %108 = vst.msk [vmem:[#allocation3] sm:$0xff] %vm91, %v106
      %109 = vst.msk [vmem:[#allocation3 + $0x8] sm:$0xff] %vm91, %v107
    $region21: #{transformer_forward.49} parent=1 // pred_fallthru
      _
    // Predicated region
    $region22: #{transformer_forward.49} parent=1 // pred_check
      _
    $region23: #{transformer_forward.49} parent=1 // pred_check_branch
      %111 = sbr.rel (0) target = $region25
    $region24: #{transformer_forward.49} parent=1 // pred_region
      %s113 = ssub.s32 256, 256
      %114 = vsyncadd [#allocation4], %s113
      %s115 = sshll.u32 [#allocation3], 4
      %s116 = int_to_ptr.vmem [resolvable:$true] %s115
      %121 = dma.vmem_to_hbm [thread:$0]  %s116, 256, %s3, [#allocation4], 128, 128, 8
    $region25: #{transformer_forward.49} parent=1 // pred_fallthru
      _
    // Predicated region
    $region26: #{transformer_forward.49} parent=1 // pred_check
      _
    $region27: #{transformer_forward.49} parent=1 // pred_check_branch
      %123 = sbr.rel (0) target = $region29
    $region28: #{transformer_forward.49} parent=1 // pred_region
      %124 = dma.done [#allocation4], 256
    $region29: #{transformer_forward.49} parent=1 // pred_fallthru
      _
    %125 = vsyncpa [#allocation4], 1

// kernel: transformer_forward.28
$region0: #{transformer_forward.28}
  #allocation0 [shape = 'u32[]', space=smem, size = 0x4, offset = 0x4, fixed_abs, tag = 'smem constant byte address 0x4 - core index']
  #allocation1 [shape = 'u32[144,128]{1,0:T(1,128)}', space=vmem, size = 0x12000, scoped, tag = 'internal scratch']
  #allocation2 [shape = 'f32[16,32]{1,0:T(8,128)}', space=vmem, size = 0x2000, scoped, tag = 'scratch operand']
  %s0 = inlined_call_operand.vmem [shape: f32[16,32], index: 0, kind: input, shape index: {}, may-alias: {0,5}]
  %s1 = inlined_call_operand.vmem [shape: bf16[32,64], index: 1, kind: input, shape index: {}]
  %s2 = inlined_call_operand.vmem [shape: f32[1,64], index: 2, kind: input, shape index: {}]
  %s3 = inlined_call_operand.vmem [shape: bf16[64,32], index: 3, kind: input, shape index: {}]
  %s4 = inlined_call_operand.vmem [shape: f32[1,32], index: 4, kind: input, shape index: {}]
  %s5 = inlined_call_operand.vmem [shape: f32[16,32], index: 5, kind: input, shape index: {}, may-alias: {0,5}]
  %s6 = inlined_call_operand.vmem [shape: f32[1,32], index: 6, kind: input, shape index: {}]
  %s7 = inlined_call_operand.vmem [shape: f32[1,32], index: 7, kind: input, shape index: {}]
  %s8 = inlined_call_operand.vmem [shape: f32[16,32], index: 8, kind: output, shape index: {}]
  %s9 = sld [smem:[#allocation0]]
  $region50: #{transformer_forward.28} parent=0
    _
  %s11 = ssub.s32 1, %s9
  %s12 = scalar_select 0, %s11, %s9
  // Predicated region
  $region2: #{transformer_forward.28} parent=0 // pred_check
    _
  $region3: #{transformer_forward.28} parent=0 // pred_check_branch
    %14 = sbr.rel (0) target = $region5
  $region4: #{transformer_forward.28} parent=0 // pred_region
    _
  $region5: #{transformer_forward.28} parent=0 // pred_fallthru
    _
  // Predicated region
  $region6: #{transformer_forward.28} parent=0 // pred_check
    _
  $region7: #{transformer_forward.28} parent=0 // pred_check_branch
    %16 = sbr.rel (0) target = $region9
  $region8: #{transformer_forward.28} parent=0 // pred_region
    _
  $region9: #{transformer_forward.28} parent=0 // pred_fallthru
    _
  // Predicated region
  $region10: #{transformer_forward.28} parent=0 // pred_check
    _
  $region11: #{transformer_forward.28} parent=0 // pred_check_branch
    %18 = sbr.rel (0) target = $region13
  $region12: #{transformer_forward.28} parent=0 // pred_region
    _
  $region13: #{transformer_forward.28} parent=0 // pred_fallthru
    _
  // Predicated region
  $region14: #{transformer_forward.28} parent=0 // pred_check
    _
  $region15: #{transformer_forward.28} parent=0 // pred_check_branch
    %20 = sbr.rel (0) target = $region17
  $region16: #{transformer_forward.28} parent=0 // pred_region
    _
  $region17: #{transformer_forward.28} parent=0 // pred_fallthru
    _
  // Predicated region
  $region18: #{transformer_forward.28} parent=0 // pred_check
    _
  $region19: #{transformer_forward.28} parent=0 // pred_check_branch
    %22 = sbr.rel (0) target = $region21
  $region20: #{transformer_forward.28} parent=0 // pred_region
    _
  $region21: #{transformer_forward.28} parent=0 // pred_fallthru
    _
  // Predicated region
  $region22: #{transformer_forward.28} parent=0 // pred_check
    _
  $region23: #{transformer_forward.28} parent=0 // pred_check_branch
    %24 = sbr.rel (0) target = $region25
  $region24: #{transformer_forward.28} parent=0 // pred_region
    _
  $region25: #{transformer_forward.28} parent=0 // pred_fallthru
    _
  // Predicated region
  $region26: #{transformer_forward.28} parent=0 // pred_check
    _
  $region27: #{transformer_forward.28} parent=0 // pred_check_branch
    %26 = sbr.rel (0) target = $region29
  $region28: #{transformer_forward.28} parent=0 // pred_region
    _
  $region29: #{transformer_forward.28} parent=0 // pred_fallthru
    _
  // Predicated region
  $region30: #{transformer_forward.28} parent=0 // pred_check
    _
  $region31: #{transformer_forward.28} parent=0 // pred_check_branch
    %28 = sbr.rel (0) target = $region33
  $region32: #{transformer_forward.28} parent=0 // pred_region
    _
  $region33: #{transformer_forward.28} parent=0 // pred_fallthru
    _
  %p30 = scmp.eq.s32.totalorder 0, 0
  // Predicated region
  $region34: #{transformer_forward.28} parent=0 // pred_check
    %p31 = pneg %p30
  $region35: #{transformer_forward.28} parent=0 // pred_check_branch
    %33 = sbr.rel (%p31) target = $region37
  $region36: #{transformer_forward.28} parent=0 // pred_region
    %vm34 = vcmask 261120
    %35 = vst.msk [vmem:[#allocation2] sm:$0xff] %vm34, 0.0
    %36 = vst.msk [vmem:[#allocation2 + $0x8] sm:$0xff] %vm34, 0.0
  $region37: #{transformer_forward.28} parent=0 // pred_fallthru
    _
  %v37 = vld [vmem:[%s0] sm:$0xff]
  %v38 = vld [vmem:[%s0 + $0x8] sm:$0xff]
  %v39 = vpack.c.bf16 %v38, %v37
  %v40 = vld [vmem:[%s1] sm:$0xf]
  %v41 = vld [vmem:[%s1 + $0x4] sm:$0xf]
  %v42 = vld [vmem:[%s1 + $0x8] sm:$0xf]
  %v43 = vld [vmem:[%s1 + $0xc] sm:$0xf]
  %v44 = vld [vmem:[%s2] sm:$0x1]
  %v46 = vlaneseq
  %v47 = vshrl.u32 %v46, 7
  %v48 = vsub.s32 0, %v47
  %v49 = vrot.slane %v44, %v48
  %v55 = vunpack.c.l.b16 %v40
  %v56 = vunpack.c.l.b16 %v41
  %v57 = vunpack.c.l.b16 %v42
  %v58 = vunpack.c.l.b16 %v43
  %v59 = vpack.c.b16 %v56, %v55
  %v60 = vpack.c.b16 %v58, %v57
  %vm63 = vcmask 261120
  %v65 = vsel %vm63, %v39, 0
  %67 = vmatprep.subr.bf16.mxu0 0
  %68 = vmatpush1.bf16.msra.mxu0 %v59
  %69 = vmatprep.subr.bf16.mxu0 0
  %70 = vmatpush1.bf16.msra.mxu0 %v60
  %71 = vmatprep.subr.bf16.mxu0 0
  %72 = vmatpush1.bf16.msra.mxu0 0
  %73 = vmatprep.subr.bf16.mxu0 0
  %74 = vmatpush1.bf16.msra.mxu0 0
  %75 = vmatprep.subr.bf16.mxu0 0
  %76 = vmatpush1.bf16.msra.mxu0 0
  %77 = vmatprep.subr.bf16.mxu0 0
  %78 = vmatpush1.bf16.msra.mxu0 0
  %79 = vmatprep.subr.bf16.mxu0 0
  %80 = vmatpush1.bf16.msra.mxu0 0
  %81 = vmatprep.subr.bf16.mxu0 0
  %82 = vmatpush1.bf16.msra.mxu0 0
  %83 = vmatprep.subr.bf16.mxu0 0
  %84 = vmatpush1.bf16.msra.mxu0 0
  %85 = vmatprep.subr.bf16.mxu0 0
  %86 = vmatpush1.bf16.msra.mxu0 0
  %87 = vmatprep.subr.bf16.mxu0 0
  %88 = vmatpush1.bf16.msra.mxu0 0
  %89 = vmatprep.subr.bf16.mxu0 0
  %90 = vmatpush1.bf16.msra.mxu0 0
  %91 = vmatprep.subr.bf16.mxu0 0
  %92 = vmatpush1.bf16.msra.mxu0 0
  %93 = vmatprep.subr.bf16.mxu0 0
  %94 = vmatpush1.bf16.msra.mxu0 0
  %95 = vmatprep.subr.bf16.mxu0 0
  %96 = vmatpush1.bf16.msra.mxu0 0
  %97 = vmatprep.subr.bf16.mxu0 0
  %98 = vmatpush1.bf16.msra.mxu0 0
  %99 = vmatprep.mubr.bf16.mxu0 0
  %100 = vmatmul.mubr.bf16.gmra.mrb[0].mxu0 %v65
  %v101 = vpop.f32.mrb[0].mxu0
  %v102 = vadd.f32 %v49, %v101
  %v103 = vpop.f32.mrb[0].mxu0
  %v104 = vpop.f32.mrb[0].mxu0
  %v105 = vadd.f32 %v49, %v104
  %v106 = vpop.f32.mrb[0].mxu0
  %107 = vdwg.mxu0
  %v108 = vmax.f32 %v102, 0.0
  %v109 = vmax.f32 %v105, 0.0
  %v110 = vld [vmem:[#allocation2] sm:$0xff]
  %v111 = vld [vmem:[#allocation2 + $0x8] sm:$0xff]
  %v112 = vpack.c.bf16 %v109, %v108
  %v113 = vld [vmem:[%s3] sm:$0xf]
  %v114 = vld [vmem:[%s3 + $0x4] sm:$0xf]
  %v115 = vld [vmem:[%s3 + $0x8] sm:$0xf]
  %v116 = vld [vmem:[%s3 + $0xc] sm:$0xf]
  %v117 = vld [vmem:[%s3 + $0x10] sm:$0xf]
  %v118 = vld [vmem:[%s3 + $0x14] sm:$0xf]
  %v119 = vld [vmem:[%s3 + $0x18] sm:$0xf]
  %v120 = vld [vmem:[%s3 + $0x1c] sm:$0xf]
  %v129 = vunpack.c.l.b16 %v113
  %v130 = vunpack.c.l.b16 %v114
  %v131 = vunpack.c.l.b16 %v115
  %v132 = vunpack.c.l.b16 %v116
  %v133 = vunpack.c.l.b16 %v117
  %v134 = vunpack.c.l.b16 %v118
  %v135 = vunpack.c.l.b16 %v119
  %v136 = vunpack.c.l.b16 %v120
  %v137 = vpack.c.b16 %v130, %v129
  %v138 = vpack.c.b16 %v132, %v131
  %v139 = vpack.c.b16 %v134, %v133
  %v140 = vpack.c.b16 %v136, %v135
  %vm145 = vcmask 523264
  %v147 = vsel %vm145, %v112, 0
  %149 = vmatprep.subr.bf16.mxu0 0
  %150 = vmatpush1.bf16.msra.mxu0 %v137
  %151 = vmatprep.subr.bf16.mxu0 0
  %152 = vmatpush1.bf16.msra.mxu0 %v138
  %153 = vmatprep.subr.bf16.mxu0 0
  %154 = vmatpush1.bf16.msra.mxu0 %v139
  %155 = vmatprep.subr.bf16.mxu0 0
  %156 = vmatpush1.bf16.msra.mxu0 %v140
  %157 = vmatprep.subr.bf16.mxu0 0
  %158 = vmatpush1.bf16.msra.mxu0 0
  %159 = vmatprep.subr.bf16.mxu0 0
  %160 = vmatpush1.bf16.msra.mxu0 0
  %161 = vmatprep.subr.bf16.mxu0 0
  %162 = vmatpush1.bf16.msra.mxu0 0
  %163 = vmatprep.subr.bf16.mxu0 0
  %164 = vmatpush1.bf16.msra.mxu0 0
  %165 = vmatprep.subr.bf16.mxu0 0
  %166 = vmatpush1.bf16.msra.mxu0 0
  %167 = vmatprep.subr.bf16.mxu0 0
  %168 = vmatpush1.bf16.msra.mxu0 0
  %169 = vmatprep.subr.bf16.mxu0 0
  %170 = vmatpush1.bf16.msra.mxu0 0
  %171 = vmatprep.subr.bf16.mxu0 0
  %172 = vmatpush1.bf16.msra.mxu0 0
  %173 = vmatprep.subr.bf16.mxu0 0
  %174 = vmatpush1.bf16.msra.mxu0 0
  %175 = vmatprep.subr.bf16.mxu0 0
  %176 = vmatpush1.bf16.msra.mxu0 0
  %177 = vmatprep.subr.bf16.mxu0 0
  %178 = vmatpush1.bf16.msra.mxu0 0
  %179 = vmatprep.subr.bf16.mxu0 0
  %180 = vmatpush1.bf16.msra.mxu0 0
  %181 = vmatprep.mubr.bf16.mxu0 0
  %182 = vmatmul.mubr.bf16.gmra.mrb[0].mxu0 %v147
  %v183 = vpop.f32.mrb[0].mxu0
  %v184 = vadd.f32 0.0, %v183
  %v185 = vpop.f32.mrb[0].mxu0
  %v186 = vpop.f32.mrb[0].mxu0
  %v187 = vadd.f32 0.0, %v186
  %v188 = vpop.f32.mrb[0].mxu0
  %189 = vdwg.mxu0
  %v190 = vadd.f32 %v110, %v184
  %v191 = vadd.f32 %v111, %v187
  %192 = vst.msk [vmem:[#allocation2] sm:$0xff] %vm63, %v190
  %193 = vst.msk [vmem:[#allocation2 + $0x8] sm:$0xff] %vm63, %v191
  // Predicated region
  $region38: #{transformer_forward.28} parent=0 // pred_check
    %p194 = pneg %p30
  $region39: #{transformer_forward.28} parent=0 // pred_check_branch
    %196 = sbr.rel (%p194) target = $region41
  $region40: #{transformer_forward.28} parent=0 // pred_region
    %v197 = vld [vmem:[#allocation2] sm:$0xff]
    %v198 = vld [vmem:[#allocation2 + $0x8] sm:$0xff]
    %v199 = vld [vmem:[%s4] sm:$0x1]
    %v201 = vlaneseq
    %v202 = vshrl.u32 %v201, 7
    %v203 = vsub.s32 0, %v202
    %v204 = vrot.slane %v199, %v203
    %v206 = vadd.f32 %v197, %v204
    %v207 = vadd.f32 %v198, %v204
    %v208 = vld [vmem:[%s5] sm:$0xff]
    %v209 = vld [vmem:[%s5 + $0x8] sm:$0xff]
    %v210 = vadd.f32 %v206, %v208
    %v211 = vadd.f32 %v207, %v209
    %v212 = vsel %vm63, %v210, 0.0
    %213 = vadd.xlane.f32.xlu0 %v212
    %v214 = vpop.xlane.xlu0 %213
    %v215 = vsel %vm63, %v211, 0.0
    %216 = vadd.xlane.f32.xlu0 %v215
    %v217 = vpop.xlane.xlu0 %216
    %v218 = vrcp.pop 32.0
    %v219 = vmul.f32 %v214, %v218
    %v220 = vmul.f32 %v217, %v218
    %v221 = vsub.f32 %v210, %v219
    %v222 = vsub.f32 %v211, %v220
    %v223 = vmul.f32 %v221, %v221
    %v224 = vmul.f32 %v222, %v222
    %v225 = vsel %vm63, %v223, 0.0
    %226 = vadd.xlane.f32.xlu0 %v225
    %v227 = vpop.xlane.xlu0 %226
    %v228 = vsel %vm63, %v224, 0.0
    %229 = vadd.xlane.f32.xlu0 %v228
    %v230 = vpop.xlane.xlu0 %229
    %v231 = vmul.f32 %v227, %v218
    %v232 = vmul.f32 %v230, %v218
    %v233 = vadd.f32 %v231, 1e-12
    %v234 = vadd.f32 %v232, 1e-12
    %v235 = vrsqrt.pop %v233
    %v236 = vrsqrt.pop %v234
    %v237 = vmul.f32 %v221, %v235
    %v238 = vmul.f32 %v222, %v236
    %v239 = vld [vmem:[%s6] sm:$0x1]
    %v241 = vlaneseq
    %v242 = vshrl.u32 %v241, 7
    %v243 = vsub.s32 0, %v242
    %v244 = vrot.slane %v239, %v243
    %v246 = vmul.f32 %v237, %v244
    %v247 = vmul.f32 %v238, %v244
    %v248 = vld [vmem:[%s7] sm:$0x1]
    %v250 = vlaneseq
    %v251 = vshrl.u32 %v250, 7
    %v252 = vsub.s32 0, %v251
    %v253 = vrot.slane %v248, %v252
    %v255 = vadd.f32 %v246, %v253
    %v256 = vadd.f32 %v247, %v253
    %257 = vst.msk [vmem:[%s8] sm:$0xff] %vm63, %v255
    %258 = vst.msk [vmem:[%s8 + $0x8] sm:$0xff] %vm63, %v256
  $region41: #{transformer_forward.28} parent=0 // pred_fallthru
    _
  // Predicated region
  $region42: #{transformer_forward.28} parent=0 // pred_check
    _
  $region43: #{transformer_forward.28} parent=0 // pred_check_branch
    %260 = sbr.rel (0) target = $region45
  $region44: #{transformer_forward.28} parent=0 // pred_region
    _
  $region45: #{transformer_forward.28} parent=0 // pred_fallthru
    _
  // Predicated region
  $region46: #{transformer_forward.28} parent=0 // pred_check
    _
  $region47: #{transformer_forward.28} parent=0 // pred_check_branch
    %262 = sbr.rel (0) target = $region49
  $region48: #{transformer_forward.28} parent=0 // pred_region
    _
  $region49: #{transformer_forward.28} parent=0 // pred_fallthru
    _

</llo_original>
